<compile_context>
chip_gen: v5e
topology: v5e:2x2
jax: 0.10.0
libtpu: 0.0.40
codegen_flags: <defaults>
</compile_context>

<pallas_src>
import jax
import jax.numpy as jnp
import numpy as np
from jax.experimental import pallas as pl
from jax.experimental.pallas import tpu as pltpu


def _round_up(v, m):
    return ((v + m - 1) // m) * m


# ---------------------------------------------------------------------------
# Fused Pallas kernel (one batch tile of BT samples per grid step)
# ---------------------------------------------------------------------------
def _servernet_kernel(x_ref, w1_ref, b1_ref, f1_ref, b1c_ref, w2c_ref, b2c_ref,
                      w2f_ref, b2_ref, w3_ref, b3_ref, out_ref,
                      c1rows_ref, pool_ref):
    BT = x_ref.shape[0]
    f32, bf16 = jnp.float32, jnp.bfloat16

    # fc1 + ReLU  (outputs padded 96 -> 128 lanes; pad lanes stay exactly 0).
    h = jnp.dot(x_ref[...].astype(bf16), w1_ref[...], preferred_element_type=f32)
    h = jnp.maximum(h + b1_ref[...], 0.0)                        # (BT, 128) f32

    # conv1 + ReLU as ONE wide matmul.  F1[e, ho*128 + wo*32 + ci] carries the 3x3
    # taps of the 16x6 image view of the fc1 output, so the matmul directly produces
    # all 14 output rows per sample: lanes = (ho, wo, ci) = 14*4*32 = 1792.
    c1w = jnp.dot(h.astype(bf16), f1_ref[...], preferred_element_type=f32)
    c1w = jnp.maximum(c1w + b1c_ref[...], 0.0).astype(bf16)      # (BT, 1792) bf16

    # Re-layout to rows=(ho, b), lanes=(wo, ci): 14 aligned full-vreg copies.
    for ho in range(14):
        c1rows_ref[ho * BT:(ho + 1) * BT, :] = c1w[:, ho * 128:(ho + 1) * 128]

    # conv2 + ReLU: width taps folded into 3 lane-dense (128,128) weights; the three
    # height taps are sublane-aligned row slices of the scratch.
    acc = jnp.dot(c1rows_ref[0:12 * BT, :], w2c_ref[0], preferred_element_type=f32)
    acc = acc + jnp.dot(c1rows_ref[BT:13 * BT, :], w2c_ref[1], preferred_element_type=f32)
    acc = acc + jnp.dot(c1rows_ref[2 * BT:14 * BT, :], w2c_ref[2], preferred_element_type=f32)
    c2 = jnp.maximum(acc + b2c_ref[...], 0.0)                    # (12*BT, 128) f32

    # 2x2 max pool: width via the two 64-lane halves, height via row-block pairs.
    # Pooled activations are packed into a (BT, 384) scratch so fc2 is ONE K=384 matmul
    # (the NCHW torch.flatten permutation is folded into the fc2 weight rows).
    m_w = jnp.maximum(c2[:, 0:64], c2[:, 64:128])                # (12*BT, 64)
    for hp in range(6):
        pool_ref[:, hp * 64:(hp + 1) * 64] = jnp.maximum(
            m_w[(2 * hp) * BT:(2 * hp + 1) * BT, :],
            m_w[(2 * hp + 1) * BT:(2 * hp + 2) * BT, :])

    # fc2 + ReLU.
    h2 = jnp.dot(pool_ref[...].astype(bf16), w2f_ref[...], preferred_element_type=f32)
    h2 = jnp.maximum(h2 + b2_ref[...], 0.0)                      # (BT, 128) f32

    # fc3 + log_softmax over 128 padded class lanes (lanes >= 10 carry a -1e30 bias,
    # so exp underflows to exactly 0 and the softmax over the 10 real classes is exact).
    logits = jnp.dot(h2.astype(bf16), w3_ref[...], preferred_element_type=f32) + b3_ref[...]
    m = jnp.max(logits, axis=-1, keepdims=True)
    e = jnp.exp(logits - m)
    lse = jnp.log(jnp.sum(e, axis=-1, keepdims=True))
    out_ref[...] = (logits - m - lse).astype(out_ref.dtype)


# ---------------------------------------------------------------------------
# One-time weight repacking (host side, outside the jitted forward)
# ---------------------------------------------------------------------------
def prepare_params(params):
    """Repack PyTorch-convention weights into kernel-ready, lane-dense tensors."""
    c1w = np.asarray(params["conv1_w"], np.float32)   # (32, 1, 3, 3)
    c1b = np.asarray(params["conv1_b"], np.float32)   # (32,)
    c2w = np.asarray(params["conv2_w"], np.float32)   # (64, 32, 3, 3)
    c2b = np.asarray(params["conv2_b"], np.float32)   # (64,)
    w1 = np.asarray(params["w1"], np.float32)          # (n_input*128, 96)
    b1 = np.asarray(params["b1"], np.float32)
    w2 = np.asarray(params["w2"], np.float32)          # (384, 128)
    b2 = np.asarray(params["b2"], np.float32)
    w3 = np.asarray(params["w3"], np.float32)          # (128, 10)
    b3 = np.asarray(params["b3"], np.float32)

    kin = w1.shape[0]

    # fc1 weight/bias padded to 128 output lanes (cols 96..127 zero).
    w1p = np.zeros((kin, 128), np.float32); w1p[:, :96] = w1
    b1p = np.zeros((1, 128), np.float32); b1p[0, :96] = b1

    # conv1 as one wide matmul: F1[e, ho*128 + wo*32 + ci] = conv1_w[ci, 0, i, j]
    # with e = 6*(ho+i) + wo + j  (fc1 output viewed as a 16x6 image).  Rows >= 96 zero.
    F1 = np.zeros((128, 14 * 128), np.float32)
    for ho in range(14):
        for i in range(3):
            for j in range(3):
                for wo in range(4):
                    e = 6 * (ho + i) + wo + j
                    F1[e, ho * 128 + wo * 32: ho * 128 + (wo + 1) * 32] = c1w[:, 0, i, j]
    b1c = np.tile(c1b, 14 * 4).reshape(1, 14 * 128)    # bias per (ho, wo, ci) lane

    # conv2 taps with the width offset j folded in:
    # W2c[i, w1pos*32 + ci, wo2*64 + co] = conv2_w[co, ci, i, w1pos - wo2] (when valid).
    W2c = np.zeros((3, 128, 128), np.float32)
    for i in range(3):
        for w1pos in range(4):
            for wo2 in range(2):
                j = w1pos - wo2
                if 0 <= j <= 2:
                    W2c[i, w1pos * 32:(w1pos + 1) * 32,
                        wo2 * 64:(wo2 + 1) * 64] = c2w[:, :, i, j].T
    b2c = np.tile(c2b, 2).reshape(1, 128)               # bias per (wo2, co) lane

    # fc2 weights with the NCHW flatten permutation folded in:
    # W2f[hp*64 + co, n] = w2[co*6 + hp, n].
    W2f = w2.reshape(64, 6, 128).transpose(1, 0, 2).reshape(384, 128)
    b2r = b2.reshape(1, 128)

    # fc3 padded to 128 class lanes; padded lanes get a hugely negative bias.
    w3p = np.zeros((128, 128), np.float32); w3p[:, :10] = w3
    b3p = np.full((1, 128), -1e30, np.float32); b3p[0, :10] = b3

    bf16 = jnp.bfloat16
    return {
        "w1": jnp.asarray(w1p, bf16), "b1": jnp.asarray(b1p),
        "f1": jnp.asarray(F1, bf16), "b1c": jnp.asarray(b1c),
        "w2c": jnp.asarray(W2c, bf16), "b2c": jnp.asarray(b2c),
        "w2f": jnp.asarray(W2f, bf16), "b2": jnp.asarray(b2r),
        "w3": jnp.asarray(w3p, bf16), "b3": jnp.asarray(b3p),
    }


# ---------------------------------------------------------------------------
# Wrapper: batch-tiled pallas_call
# ---------------------------------------------------------------------------
def servernet_forward(x, p, *, block_batch=128):
    """x: (B, n_input*128) float32 -> (B, 10) log-probabilities.  p = prepare_params(...)."""
    B, kin = x.shape
    bt = _round_up(min(block_batch, _round_up(B, 16)), 16)   # multiple of 16 (bf16 tile)
    Bp = _round_up(B, bt)
    if Bp != B:
        x = jnp.pad(x, ((0, Bp - B), (0, 0)))

    weight_bytes = sum(int(np.prod(p[k].shape)) * p[k].dtype.itemsize for k in p)
    flops = 2 * (kin * 128 + 128 * 14 * 128 + 12 * 3 * 128 * 128
                 + 384 * 128 + 128 * 128) * Bp

    def _const(nd):
        return lambda i, _nd=nd: (0,) * _nd

    def w_spec(a):
        return pl.BlockSpec(a.shape, _const(a.ndim))   # resident: constant block index

    out = pl.pallas_call(
        _servernet_kernel,
        out_shape=jax.ShapeDtypeStruct((Bp, 128), jnp.float32),
        grid=(Bp // bt,),
        in_specs=[pl.BlockSpec((bt, kin), lambda i: (i, 0)),
                  w_spec(p["w1"]), w_spec(p["b1"]), w_spec(p["f1"]), w_spec(p["b1c"]),
                  w_spec(p["w2c"]), w_spec(p["b2c"]), w_spec(p["w2f"]), w_spec(p["b2"]),
                  w_spec(p["w3"]), w_spec(p["b3"])],
        out_specs=pl.BlockSpec((bt, 128), lambda i: (i, 0)),
        scratch_shapes=[pltpu.VMEM((14 * bt, 128), jnp.bfloat16),   # conv1 rows (ho, b)
                        pltpu.VMEM((bt, 384), jnp.float32)],        # pooled flat acts
        compiler_params=pltpu.CompilerParams(
            dimension_semantics=("parallel",),
            vmem_limit_bytes=32 * 1024 * 1024),
        cost_estimate=pl.CostEstimate(
            flops=int(flops),
            transcendentals=int(129 * Bp),
            bytes_accessed=int(Bp * (kin + 128) * 4 + weight_bytes)),
    )(x, p["w1"], p["b1"], p["f1"], p["b1c"], p["w2c"], p["b2c"],
      p["w2f"], p["b2"], p["w3"], p["b3"])
    return out[:B, :10]


# ---------------------------------------------------------------------------
# Pure-JAX reference (for correctness check).  matmul_dtype=bf16 mirrors the
# kernel's bf16-in / f32-accumulate MXU precision.
# ---------------------------------------------------------------------------
def reference_forward(x, params, matmul_dtype=jnp.float32):
    md, f32 = matmul_dtype, jnp.float32
    B = x.shape[0]

    def mm(a, b):
        return jnp.dot(a.astype(md), b.astype(md), preferred_element_type=f32)

    h = jax.nn.relu(mm(x, params["w1"]) + params["b1"])
    img = h.reshape(B, 1, 16, -1)
    dn = ("NCHW", "OIHW", "NCHW")
    c1 = jax.lax.conv_general_dilated(img.astype(md), params["conv1_w"].astype(md),
                                      (1, 1), "VALID", dimension_numbers=dn,
                                      preferred_element_type=f32)
    c1 = jax.nn.relu(c1 + params["conv1_b"][None, :, None, None])
    c2 = jax.lax.conv_general_dilated(c1.astype(md), params["conv2_w"].astype(md),
                                      (1, 1), "VALID", dimension_numbers=dn,
                                      preferred_element_type=f32)
    c2 = jax.nn.relu(c2 + params["conv2_b"][None, :, None, None])
    pool = jax.lax.reduce_window(c2, -jnp.inf, jax.lax.max,
                                 (1, 1, 2, 2), (1, 1, 2, 2), "VALID")
    f = pool.reshape(B, -1)
    h2 = jax.nn.relu(mm(f, params["w2"]) + params["b2"])
    s = mm(h2, params["w3"]) + params["b3"]
    return jax.nn.log_softmax(s, axis=1)


# ---------------------------------------------------------------------------
# Main
# ---------------------------------------------------------------------------
if __name__ == "__main__":
    n_input = 2       # fc1 input dim = n_input * 128 = 256
    B = 2             # batch

    key = jax.random.PRNGKey(0)
    ks = jax.random.split(key, 12)
    s = 0.05
    params = {
        # fc1: Linear(256, 96); stored transposed (in, out)
        "w1": jax.random.normal(ks[0], (n_input * 128, 96), jnp.float32) * s,
        "b1": jax.random.normal(ks[1], (96,), jnp.float32) * s,
        # conv1: Conv2d(1, 32, 3)  weight OIHW
        "conv1_w": jax.random.normal(ks[2], (32, 1, 3, 3), jnp.float32) * s,
        "conv1_b": jax.random.normal(ks[3], (32,), jnp.float32) * s,
        # conv2: Conv2d(32, 64, 3)
        "conv2_w": jax.random.normal(ks[4], (64, 32, 3, 3), jnp.float32) * s,
        "conv2_b": jax.random.normal(ks[5], (64,), jnp.float32) * s,
        # fc2: Linear(384, 128)
        "w2": jax.random.normal(ks[6], (384, 128), jnp.float32) * s,
        "b2": jax.random.normal(ks[7], (128,), jnp.float32) * s,
        # fc3: Linear(128, 10)
        "w3": jax.random.normal(ks[8], (128, 10), jnp.float32) * s,
        "b3": jax.random.normal(ks[9], (10,), jnp.float32) * s,
    }

    x = jax.random.normal(ks[11], (B, n_input * 128), jnp.float32)

    prepared = prepare_params(params)          # one-time weight repack + bf16 cast
    fwd = jax.jit(servernet_forward)

    out = jax.block_until_ready(fwd(x, prepared))
    assert out.shape == (B, 10), out.shape

    # Tight check against a reference that mirrors the kernel's bf16/f32 MXU precision,
    # plus a looser check against the pure-f32 module semantics.
    ref_bf = reference_forward(x, params, matmul_dtype=jnp.bfloat16)
    ref_32 = reference_forward(x, params, matmul_dtype=jnp.float32)
    err_bf = float(jnp.max(jnp.abs(out - ref_bf)))
    err_32 = float(jnp.max(jnp.abs(out - ref_32)))
    assert err_bf < 5e-3, f"mismatch vs bf16-matched reference: max|diff|={err_bf}"
    assert err_32 < 3e-2, f"mismatch vs f32 reference: max|diff|={err_32}"

    print("KERNEL_OK")
</pallas_src>

<mosaic_0001>
module attributes {stable_mosaic.version = 11 : i64} {
  func.func @_servernet_kernel(%arg0: i32, %arg1: memref<16x256xf32, #tpu.memory_space<vmem>>, %arg2: memref<256x128xbf16, #tpu.memory_space<vmem>>, %arg3: memref<1x128xf32, #tpu.memory_space<vmem>>, %arg4: memref<128x1792xbf16, #tpu.memory_space<vmem>>, %arg5: memref<1x1792xf32, #tpu.memory_space<vmem>>, %arg6: memref<3x128x128xbf16, #tpu.memory_space<vmem>>, %arg7: memref<1x128xf32, #tpu.memory_space<vmem>>, %arg8: memref<384x128xbf16, #tpu.memory_space<vmem>>, %arg9: memref<1x128xf32, #tpu.memory_space<vmem>>, %arg10: memref<128x128xbf16, #tpu.memory_space<vmem>>, %arg11: memref<1x128xf32, #tpu.memory_space<vmem>>, %arg12: memref<16x128xf32, #tpu.memory_space<vmem>>, %arg13: memref<224x128xbf16, #tpu.memory_space<vmem>>, %arg14: memref<16x384xf32, #tpu.memory_space<vmem>>) attributes {dimension_semantics = [#tpu.dimension_semantics<parallel>], iteration_bounds = array<i64: 1>, scalar_prefetch = 0 : i64, scratch_operands = 2 : i64, tpu.core_type = #tpu.core_type<tc>, window_params = [{transform_indices = @transform_0, window_bounds = array<i64: 16, 256>}, {pipeline_mode = #tpu.pipeline_mode<synchronous>, transform_indices = @transform_1, window_bounds = array<i64: 256, 128>}, {pipeline_mode = #tpu.pipeline_mode<synchronous>, transform_indices = @transform_2, window_bounds = array<i64: 1, 128>}, {pipeline_mode = #tpu.pipeline_mode<synchronous>, transform_indices = @transform_3, window_bounds = array<i64: 128, 1792>}, {pipeline_mode = #tpu.pipeline_mode<synchronous>, transform_indices = @transform_4, window_bounds = array<i64: 1, 1792>}, {pipeline_mode = #tpu.pipeline_mode<synchronous>, transform_indices = @transform_5, window_bounds = array<i64: 3, 128, 128>}, {pipeline_mode = #tpu.pipeline_mode<synchronous>, transform_indices = @transform_6, window_bounds = array<i64: 1, 128>}, {pipeline_mode = #tpu.pipeline_mode<synchronous>, transform_indices = @transform_7, window_bounds = array<i64: 384, 128>}, {pipeline_mode = #tpu.pipeline_mode<synchronous>, transform_indices = @transform_8, window_bounds = array<i64: 1, 128>}, {pipeline_mode = #tpu.pipeline_mode<synchronous>, transform_indices = @transform_9, window_bounds = array<i64: 128, 128>}, {pipeline_mode = #tpu.pipeline_mode<synchronous>, transform_indices = @transform_10, window_bounds = array<i64: 1, 128>}, {transform_indices = @transform_11, window_bounds = array<i64: 16, 128>}]} {
    %c0 = arith.constant 0 : index
    %c0_0 = arith.constant 0 : index
    %0 = vector.load %arg1[%c0, %c0_0] : memref<16x256xf32, #tpu.memory_space<vmem>>, vector<16x256xf32>
    %1 = arith.truncf %0 : vector<16x256xf32> to vector<16x256xbf16>
    %c0_1 = arith.constant 0 : index
    %c0_2 = arith.constant 0 : index
    %2 = vector.load %arg2[%c0_1, %c0_2] : memref<256x128xbf16, #tpu.memory_space<vmem>>, vector<256x128xbf16>
    %cst = arith.constant dense<0.000000e+00> : vector<16x128xf32>
    %3 = tpu.matmul %1, %2, %cst {dimension_numbers = #tpu.dot_dimension_numbers<[1], [0], [0], [1], [0, 0, 1, 1], [], []>} : vector<16x256xbf16>, vector<256x128xbf16>, vector<16x128xf32> -> vector<16x128xf32>
    %c0_3 = arith.constant 0 : index
    %c0_4 = arith.constant 0 : index
    %4 = vector.load %arg3[%c0_3, %c0_4] : memref<1x128xf32, #tpu.memory_space<vmem>>, vector<1x128xf32>
    %5 = vector.broadcast %4 : vector<1x128xf32> to vector<16x128xf32>
    %6 = arith.addf %3, %5 : vector<16x128xf32>
    %cst_5 = arith.constant 0.000000e+00 : f32
    %7 = vector.broadcast %cst_5 : f32 to vector<16x128xf32>
    %8 = arith.maximumf %6, %7 : vector<16x128xf32>
    %9 = arith.truncf %8 : vector<16x128xf32> to vector<16x128xbf16>
    %c0_6 = arith.constant 0 : index
    %c0_7 = arith.constant 0 : index
    %10 = vector.load %arg4[%c0_6, %c0_7] : memref<128x1792xbf16, #tpu.memory_space<vmem>>, vector<128x1792xbf16>
    %cst_8 = arith.constant dense<0.000000e+00> : vector<16x1792xf32>
    %11 = tpu.matmul %9, %10, %cst_8 {dimension_numbers = #tpu.dot_dimension_numbers<[1], [0], [0], [1], [0, 0, 1, 1], [], []>} : vector<16x128xbf16>, vector<128x1792xbf16>, vector<16x1792xf32> -> vector<16x1792xf32>
    %c0_9 = arith.constant 0 : index
    %c0_10 = arith.constant 0 : index
    %12 = vector.load %arg5[%c0_9, %c0_10] : memref<1x1792xf32, #tpu.memory_space<vmem>>, vector<1x1792xf32>
    %13 = vector.broadcast %12 : vector<1x1792xf32> to vector<16x1792xf32>
    %14 = arith.addf %11, %13 : vector<16x1792xf32>
    %cst_11 = arith.constant 0.000000e+00 : f32
    %15 = vector.broadcast %cst_11 : f32 to vector<16x1792xf32>
    %16 = arith.maximumf %14, %15 : vector<16x1792xf32>
    %17 = arith.truncf %16 : vector<16x1792xf32> to vector<16x1792xbf16>
    %18 = vector.extract_strided_slice %17 {offsets = [0, 0], sizes = [16, 128], strides = [1, 1]} : vector<16x1792xbf16> to vector<16x128xbf16>
    %c0_12 = arith.constant 0 : index
    %c0_13 = arith.constant 0 : index
    %19 = vector.load %arg13[%c0_12, %c0_13] : memref<224x128xbf16, #tpu.memory_space<vmem>>, vector<16x128xbf16>
    tpu.vector_store %arg13[%c0_12, %c0_13], %18 {strides = array<i32>} : memref<224x128xbf16, #tpu.memory_space<vmem>>, vector<16x128xbf16>,
    %20 = vector.extract_strided_slice %17 {offsets = [0, 128], sizes = [16, 128], strides = [1, 1]} : vector<16x1792xbf16> to vector<16x128xbf16>
    %c16 = arith.constant 16 : index
    %c0_14 = arith.constant 0 : index
    %21 = vector.load %arg13[%c16, %c0_14] : memref<224x128xbf16, #tpu.memory_space<vmem>>, vector<16x128xbf16>
    tpu.vector_store %arg13[%c16, %c0_14], %20 {strides = array<i32>} : memref<224x128xbf16, #tpu.memory_space<vmem>>, vector<16x128xbf16>,
    %22 = vector.extract_strided_slice %17 {offsets = [0, 256], sizes = [16, 128], strides = [1, 1]} : vector<16x1792xbf16> to vector<16x128xbf16>
    %c32 = arith.constant 32 : index
    %c0_15 = arith.constant 0 : index
    %23 = vector.load %arg13[%c32, %c0_15] : memref<224x128xbf16, #tpu.memory_space<vmem>>, vector<16x128xbf16>
    tpu.vector_store %arg13[%c32, %c0_15], %22 {strides = array<i32>} : memref<224x128xbf16, #tpu.memory_space<vmem>>, vector<16x128xbf16>,
    %24 = vector.extract_strided_slice %17 {offsets = [0, 384], sizes = [16, 128], strides = [1, 1]} : vector<16x1792xbf16> to vector<16x128xbf16>
    %c48 = arith.constant 48 : index
    %c0_16 = arith.constant 0 : index
    %25 = vector.load %arg13[%c48, %c0_16] : memref<224x128xbf16, #tpu.memory_space<vmem>>, vector<16x128xbf16>
    tpu.vector_store %arg13[%c48, %c0_16], %24 {strides = array<i32>} : memref<224x128xbf16, #tpu.memory_space<vmem>>, vector<16x128xbf16>,
    %26 = vector.extract_strided_slice %17 {offsets = [0, 512], sizes = [16, 128], strides = [1, 1]} : vector<16x1792xbf16> to vector<16x128xbf16>
    %c64 = arith.constant 64 : index
    %c0_17 = arith.constant 0 : index
    %27 = vector.load %arg13[%c64, %c0_17] : memref<224x128xbf16, #tpu.memory_space<vmem>>, vector<16x128xbf16>
    tpu.vector_store %arg13[%c64, %c0_17], %26 {strides = array<i32>} : memref<224x128xbf16, #tpu.memory_space<vmem>>, vector<16x128xbf16>,
    %28 = vector.extract_strided_slice %17 {offsets = [0, 640], sizes = [16, 128], strides = [1, 1]} : vector<16x1792xbf16> to vector<16x128xbf16>
    %c80 = arith.constant 80 : index
    %c0_18 = arith.constant 0 : index
    %29 = vector.load %arg13[%c80, %c0_18] : memref<224x128xbf16, #tpu.memory_space<vmem>>, vector<16x128xbf16>
    tpu.vector_store %arg13[%c80, %c0_18], %28 {strides = array<i32>} : memref<224x128xbf16, #tpu.memory_space<vmem>>, vector<16x128xbf16>,
    %30 = vector.extract_strided_slice %17 {offsets = [0, 768], sizes = [16, 128], strides = [1, 1]} : vector<16x1792xbf16> to vector<16x128xbf16>
    %c96 = arith.constant 96 : index
    %c0_19 = arith.constant 0 : index
    %31 = vector.load %arg13[%c96, %c0_19] : memref<224x128xbf16, #tpu.memory_space<vmem>>, vector<16x128xbf16>
    tpu.vector_store %arg13[%c96, %c0_19], %30 {strides = array<i32>} : memref<224x128xbf16, #tpu.memory_space<vmem>>, vector<16x128xbf16>,
    %32 = vector.extract_strided_slice %17 {offsets = [0, 896], sizes = [16, 128], strides = [1, 1]} : vector<16x1792xbf16> to vector<16x128xbf16>
    %c112 = arith.constant 112 : index
    %c0_20 = arith.constant 0 : index
    %33 = vector.load %arg13[%c112, %c0_20] : memref<224x128xbf16, #tpu.memory_space<vmem>>, vector<16x128xbf16>
    tpu.vector_store %arg13[%c112, %c0_20], %32 {strides = array<i32>} : memref<224x128xbf16, #tpu.memory_space<vmem>>, vector<16x128xbf16>,
    %34 = vector.extract_strided_slice %17 {offsets = [0, 1024], sizes = [16, 128], strides = [1, 1]} : vector<16x1792xbf16> to vector<16x128xbf16>
    %c128 = arith.constant 128 : index
    %c0_21 = arith.constant 0 : index
    %35 = vector.load %arg13[%c128, %c0_21] : memref<224x128xbf16, #tpu.memory_space<vmem>>, vector<16x128xbf16>
    tpu.vector_store %arg13[%c128, %c0_21], %34 {strides = array<i32>} : memref<224x128xbf16, #tpu.memory_space<vmem>>, vector<16x128xbf16>,
    %36 = vector.extract_strided_slice %17 {offsets = [0, 1152], sizes = [16, 128], strides = [1, 1]} : vector<16x1792xbf16> to vector<16x128xbf16>
    %c144 = arith.constant 144 : index
    %c0_22 = arith.constant 0 : index
    %37 = vector.load %arg13[%c144, %c0_22] : memref<224x128xbf16, #tpu.memory_space<vmem>>, vector<16x128xbf16>
    tpu.vector_store %arg13[%c144, %c0_22], %36 {strides = array<i32>} : memref<224x128xbf16, #tpu.memory_space<vmem>>, vector<16x128xbf16>,
    %38 = vector.extract_strided_slice %17 {offsets = [0, 1280], sizes = [16, 128], strides = [1, 1]} : vector<16x1792xbf16> to vector<16x128xbf16>
    %c160 = arith.constant 160 : index
    %c0_23 = arith.constant 0 : index
    %39 = vector.load %arg13[%c160, %c0_23] : memref<224x128xbf16, #tpu.memory_space<vmem>>, vector<16x128xbf16>
    tpu.vector_store %arg13[%c160, %c0_23], %38 {strides = array<i32>} : memref<224x128xbf16, #tpu.memory_space<vmem>>, vector<16x128xbf16>,
    %40 = vector.extract_strided_slice %17 {offsets = [0, 1408], sizes = [16, 128], strides = [1, 1]} : vector<16x1792xbf16> to vector<16x128xbf16>
    %c176 = arith.constant 176 : index
    %c0_24 = arith.constant 0 : index
    %41 = vector.load %arg13[%c176, %c0_24] : memref<224x128xbf16, #tpu.memory_space<vmem>>, vector<16x128xbf16>
    tpu.vector_store %arg13[%c176, %c0_24], %40 {strides = array<i32>} : memref<224x128xbf16, #tpu.memory_space<vmem>>, vector<16x128xbf16>,
    %42 = vector.extract_strided_slice %17 {offsets = [0, 1536], sizes = [16, 128], strides = [1, 1]} : vector<16x1792xbf16> to vector<16x128xbf16>
    %c192 = arith.constant 192 : index
    %c0_25 = arith.constant 0 : index
    %43 = vector.load %arg13[%c192, %c0_25] : memref<224x128xbf16, #tpu.memory_space<vmem>>, vector<16x128xbf16>
    tpu.vector_store %arg13[%c192, %c0_25], %42 {strides = array<i32>} : memref<224x128xbf16, #tpu.memory_space<vmem>>, vector<16x128xbf16>,
    %44 = vector.extract_strided_slice %17 {offsets = [0, 1664], sizes = [16, 128], strides = [1, 1]} : vector<16x1792xbf16> to vector<16x128xbf16>
    %c208 = arith.constant 208 : index
    %c0_26 = arith.constant 0 : index
    %45 = vector.load %arg13[%c208, %c0_26] : memref<224x128xbf16, #tpu.memory_space<vmem>>, vector<16x128xbf16>
    tpu.vector_store %arg13[%c208, %c0_26], %44 {strides = array<i32>} : memref<224x128xbf16, #tpu.memory_space<vmem>>, vector<16x128xbf16>,
    %c0_27 = arith.constant 0 : index
    %c0_28 = arith.constant 0 : index
    %46 = vector.load %arg13[%c0_27, %c0_28] : memref<224x128xbf16, #tpu.memory_space<vmem>>, vector<192x128xbf16>
    %c0_29 = arith.constant 0 : index
    %c0_30 = arith.constant 0 : index
    %c0_31 = arith.constant 0 : index
    %47 = vector.load %arg6[%c0_29, %c0_30, %c0_31] : memref<3x128x128xbf16, #tpu.memory_space<vmem>>, vector<1x128x128xbf16>
    %48 = vector.shape_cast %47 : vector<1x128x128xbf16> to vector<128x128xbf16>
    %cst_32 = arith.constant dense<0.000000e+00> : vector<192x128xf32>
    %49 = tpu.matmul %46, %48, %cst_32 {dimension_numbers = #tpu.dot_dimension_numbers<[1], [0], [0], [1], [0, 0, 1, 1], [], []>} : vector<192x128xbf16>, vector<128x128xbf16>, vector<192x128xf32> -> vector<192x128xf32>
    %c16_33 = arith.constant 16 : index
    %c0_34 = arith.constant 0 : index
    %50 = vector.load %arg13[%c16_33, %c0_34] : memref<224x128xbf16, #tpu.memory_space<vmem>>, vector<192x128xbf16>
    %c1 = arith.constant 1 : index
    %c0_35 = arith.constant 0 : index
    %c0_36 = arith.constant 0 : index
    %51 = vector.load %arg6[%c1, %c0_35, %c0_36] : memref<3x128x128xbf16, #tpu.memory_space<vmem>>, vector<1x128x128xbf16>
    %52 = vector.shape_cast %51 : vector<1x128x128xbf16> to vector<128x128xbf16>
    %cst_37 = arith.constant dense<0.000000e+00> : vector<192x128xf32>
    %53 = tpu.matmul %50, %52, %cst_37 {dimension_numbers = #tpu.dot_dimension_numbers<[1], [0], [0], [1], [0, 0, 1, 1], [], []>} : vector<192x128xbf16>, vector<128x128xbf16>, vector<192x128xf32> -> vector<192x128xf32>
    %54 = arith.addf %49, %53 : vector<192x128xf32>
    %c32_38 = arith.constant 32 : index
    %c0_39 = arith.constant 0 : index
    %55 = vector.load %arg13[%c32_38, %c0_39] : memref<224x128xbf16, #tpu.memory_space<vmem>>, vector<192x128xbf16>
    %c2 = arith.constant 2 : index
    %c0_40 = arith.constant 0 : index
    %c0_41 = arith.constant 0 : index
    %56 = vector.load %arg6[%c2, %c0_40, %c0_41] : memref<3x128x128xbf16, #tpu.memory_space<vmem>>, vector<1x128x128xbf16>
    %57 = vector.shape_cast %56 : vector<1x128x128xbf16> to vector<128x128xbf16>
    %cst_42 = arith.constant dense<0.000000e+00> : vector<192x128xf32>
    %58 = tpu.matmul %55, %57, %cst_42 {dimension_numbers = #tpu.dot_dimension_numbers<[1], [0], [0], [1], [0, 0, 1, 1], [], []>} : vector<192x128xbf16>, vector<128x128xbf16>, vector<192x128xf32> -> vector<192x128xf32>
    %59 = arith.addf %54, %58 : vector<192x128xf32>
    %c0_43 = arith.constant 0 : index
    %c0_44 = arith.constant 0 : index
    %60 = vector.load %arg7[%c0_43, %c0_44] : memref<1x128xf32, #tpu.memory_space<vmem>>, vector<1x128xf32>
    %61 = vector.broadcast %60 : vector<1x128xf32> to vector<192x128xf32>
    %62 = arith.addf %59, %61 : vector<192x128xf32>
    %cst_45 = arith.constant 0.000000e+00 : f32
    %63 = vector.broadcast %cst_45 : f32 to vector<192x128xf32>
    %64 = arith.maximumf %62, %63 : vector<192x128xf32>
    %65 = vector.extract_strided_slice %64 {offsets = [0, 0], sizes = [192, 64], strides = [1, 1]} : vector<192x128xf32> to vector<192x64xf32>
    %66 = vector.extract_strided_slice %64 {offsets = [0, 64], sizes = [192, 64], strides = [1, 1]} : vector<192x128xf32> to vector<192x64xf32>
    %67 = arith.maximumf %65, %66 : vector<192x64xf32>
    %68 = vector.extract_strided_slice %67 {offsets = [0, 0], sizes = [16, 64], strides = [1, 1]} : vector<192x64xf32> to vector<16x64xf32>
    %69 = vector.extract_strided_slice %67 {offsets = [16, 0], sizes = [16, 64], strides = [1, 1]} : vector<192x64xf32> to vector<16x64xf32>
    %70 = arith.maximumf %68, %69 : vector<16x64xf32>
    %c0_46 = arith.constant 0 : index
    %c0_47 = arith.constant 0 : index
    %71 = vector.load %arg14[%c0_46, %c0_47] : memref<16x384xf32, #tpu.memory_space<vmem>>, vector<16x64xf32>
    tpu.vector_store %arg14[%c0_46, %c0_47], %70 {strides = array<i32>} : memref<16x384xf32, #tpu.memory_space<vmem>>, vector<16x64xf32>,
    %72 = vector.extract_strided_slice %67 {offsets = [32, 0], sizes = [16, 64], strides = [1, 1]} : vector<192x64xf32> to vector<16x64xf32>
    %73 = vector.extract_strided_slice %67 {offsets = [48, 0], sizes = [16, 64], strides = [1, 1]} : vector<192x64xf32> to vector<16x64xf32>
    %74 = arith.maximumf %72, %73 : vector<16x64xf32>
    %c0_48 = arith.constant 0 : index
    %c64_49 = arith.constant 64 : index
    %75 = vector.load %arg14[%c0_48, %c64_49] : memref<16x384xf32, #tpu.memory_space<vmem>>, vector<16x64xf32>
    tpu.vector_store %arg14[%c0_48, %c64_49], %74 {strides = array<i32>} : memref<16x384xf32, #tpu.memory_space<vmem>>, vector<16x64xf32>,
    %76 = vector.extract_strided_slice %67 {offsets = [64, 0], sizes = [16, 64], strides = [1, 1]} : vector<192x64xf32> to vector<16x64xf32>
    %77 = vector.extract_strided_slice %67 {offsets = [80, 0], sizes = [16, 64], strides = [1, 1]} : vector<192x64xf32> to vector<16x64xf32>
    %78 = arith.maximumf %76, %77 : vector<16x64xf32>
    %c0_50 = arith.constant 0 : index
    %c128_51 = arith.constant 128 : index
    %79 = vector.load %arg14[%c0_50, %c128_51] : memref<16x384xf32, #tpu.memory_space<vmem>>, vector<16x64xf32>
    tpu.vector_store %arg14[%c0_50, %c128_51], %78 {strides = array<i32>} : memref<16x384xf32, #tpu.memory_space<vmem>>, vector<16x64xf32>,
    %80 = vector.extract_strided_slice %67 {offsets = [96, 0], sizes = [16, 64], strides = [1, 1]} : vector<192x64xf32> to vector<16x64xf32>
    %81 = vector.extract_strided_slice %67 {offsets = [112, 0], sizes = [16, 64], strides = [1, 1]} : vector<192x64xf32> to vector<16x64xf32>
    %82 = arith.maximumf %80, %81 : vector<16x64xf32>
    %c0_52 = arith.constant 0 : index
    %c192_53 = arith.constant 192 : index
    %83 = vector.load %arg14[%c0_52, %c192_53] : memref<16x384xf32, #tpu.memory_space<vmem>>, vector<16x64xf32>
    tpu.vector_store %arg14[%c0_52, %c192_53], %82 {strides = array<i32>} : memref<16x384xf32, #tpu.memory_space<vmem>>, vector<16x64xf32>,
    %84 = vector.extract_strided_slice %67 {offsets = [128, 0], sizes = [16, 64], strides = [1, 1]} : vector<192x64xf32> to vector<16x64xf32>
    %85 = vector.extract_strided_slice %67 {offsets = [144, 0], sizes = [16, 64], strides = [1, 1]} : vector<192x64xf32> to vector<16x64xf32>
    %86 = arith.maximumf %84, %85 : vector<16x64xf32>
    %c0_54 = arith.constant 0 : index
    %c256 = arith.constant 256 : index
    %87 = vector.load %arg14[%c0_54, %c256] : memref<16x384xf32, #tpu.memory_space<vmem>>, vector<16x64xf32>
    tpu.vector_store %arg14[%c0_54, %c256], %86 {strides = array<i32>} : memref<16x384xf32, #tpu.memory_space<vmem>>, vector<16x64xf32>,
    %88 = vector.extract_strided_slice %67 {offsets = [160, 0], sizes = [16, 64], strides = [1, 1]} : vector<192x64xf32> to vector<16x64xf32>
    %89 = vector.extract_strided_slice %67 {offsets = [176, 0], sizes = [16, 64], strides = [1, 1]} : vector<192x64xf32> to vector<16x64xf32>
    %90 = arith.maximumf %88, %89 : vector<16x64xf32>
    %c0_55 = arith.constant 0 : index
    %c320 = arith.constant 320 : index
    %91 = vector.load %arg14[%c0_55, %c320] : memref<16x384xf32, #tpu.memory_space<vmem>>, vector<16x64xf32>
    tpu.vector_store %arg14[%c0_55, %c320], %90 {strides = array<i32>} : memref<16x384xf32, #tpu.memory_space<vmem>>, vector<16x64xf32>,
    %c0_56 = arith.constant 0 : index
    %c0_57 = arith.constant 0 : index
    %92 = vector.load %arg14[%c0_56, %c0_57] : memref<16x384xf32, #tpu.memory_space<vmem>>, vector<16x384xf32>
    %93 = arith.truncf %92 : vector<16x384xf32> to vector<16x384xbf16>
    %c0_58 = arith.constant 0 : index
    %c0_59 = arith.constant 0 : index
    %94 = vector.load %arg8[%c0_58, %c0_59] : memref<384x128xbf16, #tpu.memory_space<vmem>>, vector<384x128xbf16>
    %cst_60 = arith.constant dense<0.000000e+00> : vector<16x128xf32>
    %95 = tpu.matmul %93, %94, %cst_60 {dimension_numbers = #tpu.dot_dimension_numbers<[1], [0], [0], [1], [0, 0, 1, 1], [], []>} : vector<16x384xbf16>, vector<384x128xbf16>, vector<16x128xf32> -> vector<16x128xf32>
    %c0_61 = arith.constant 0 : index
    %c0_62 = arith.constant 0 : index
    %96 = vector.load %arg9[%c0_61, %c0_62] : memref<1x128xf32, #tpu.memory_space<vmem>>, vector<1x128xf32>
    %97 = vector.broadcast %96 : vector<1x128xf32> to vector<16x128xf32>
    %98 = arith.addf %95, %97 : vector<16x128xf32>
    %cst_63 = arith.constant 0.000000e+00 : f32
    %99 = vector.broadcast %cst_63 : f32 to vector<16x128xf32>
    %100 = arith.maximumf %98, %99 : vector<16x128xf32>
    %101 = arith.truncf %100 : vector<16x128xf32> to vector<16x128xbf16>
    %c0_64 = arith.constant 0 : index
    %c0_65 = arith.constant 0 : index
    %102 = vector.load %arg10[%c0_64, %c0_65] : memref<128x128xbf16, #tpu.memory_space<vmem>>, vector<128x128xbf16>
    %cst_66 = arith.constant dense<0.000000e+00> : vector<16x128xf32>
    %103 = tpu.matmul %101, %102, %cst_66 {dimension_numbers = #tpu.dot_dimension_numbers<[1], [0], [0], [1], [0, 0, 1, 1], [], []>} : vector<16x128xbf16>, vector<128x128xbf16>, vector<16x128xf32> -> vector<16x128xf32>
    %c0_67 = arith.constant 0 : index
    %c0_68 = arith.constant 0 : index
    %104 = vector.load %arg11[%c0_67, %c0_68] : memref<1x128xf32, #tpu.memory_space<vmem>>, vector<1x128xf32>
    %105 = vector.broadcast %104 : vector<1x128xf32> to vector<16x128xf32>
    %106 = arith.addf %103, %105 : vector<16x128xf32>
    %cst_69 = arith.constant dense<0xFF800000> : vector<16xf32>
    %107 = vector.multi_reduction <maximumf>, %106, %cst_69 [1] : vector<16x128xf32> to vector<16xf32>
    %108 = vector.shape_cast %107 : vector<16xf32> to vector<16x1xf32>
    %109 = vector.broadcast %108 : vector<16x1xf32> to vector<16x128xf32>
    %110 = arith.subf %106, %109 : vector<16x128xf32>
    %111 = math.exp %110 : vector<16x128xf32>
    %cst_70 = arith.constant dense<0.000000e+00> : vector<16xf32>
    %112 = vector.multi_reduction <add>, %111, %cst_70 [1] : vector<16x128xf32> to vector<16xf32>
    %113 = vector.shape_cast %112 : vector<16xf32> to vector<16x1xf32>
    %114 = math.log %113 : vector<16x1xf32>
    %115 = vector.broadcast %108 : vector<16x1xf32> to vector<16x128xf32>
    %116 = arith.subf %106, %115 : vector<16x128xf32>
    %117 = vector.broadcast %114 : vector<16x1xf32> to vector<16x128xf32>
    %118 = arith.subf %116, %117 : vector<16x128xf32>
    %c0_71 = arith.constant 0 : index
    %c0_72 = arith.constant 0 : index
    %119 = vector.load %arg12[%c0_71, %c0_72] : memref<16x128xf32, #tpu.memory_space<vmem>>, vector<16x128xf32>
    tpu.vector_store %arg12[%c0_71, %c0_72], %118 {strides = array<i32>} : memref<16x128xf32, #tpu.memory_space<vmem>>, vector<16x128xf32>,
    return
  }
  func.func @transform_0(%arg0: i32) -> (i32, i32) {
    %c0_i32 = arith.constant 0 : i32
    %c0_i32_0 = arith.constant 0 : i32
    return %arg0, %c0_i32 : i32, i32
  }
  func.func @transform_1(%arg0: i32) -> (i32, i32) {
    %c0_i32 = arith.constant 0 : i32
    %c0_i32_0 = arith.constant 0 : i32
    %c0_i32_1 = arith.constant 0 : i32
    return %c0_i32, %c0_i32_0 : i32, i32
  }
  func.func @transform_2(%arg0: i32) -> (i32, i32) {
    %c0_i32 = arith.constant 0 : i32
    %c0_i32_0 = arith.constant 0 : i32
    %c0_i32_1 = arith.constant 0 : i32
    return %c0_i32, %c0_i32_0 : i32, i32
  }
  func.func @transform_3(%arg0: i32) -> (i32, i32) {
    %c0_i32 = arith.constant 0 : i32
    %c0_i32_0 = arith.constant 0 : i32
    %c0_i32_1 = arith.constant 0 : i32
    return %c0_i32, %c0_i32_0 : i32, i32
  }
  func.func @transform_4(%arg0: i32) -> (i32, i32) {
    %c0_i32 = arith.constant 0 : i32
    %c0_i32_0 = arith.constant 0 : i32
    %c0_i32_1 = arith.constant 0 : i32
    return %c0_i32, %c0_i32_0 : i32, i32
  }
  func.func @transform_5(%arg0: i32) -> (i32, i32, i32) {
    %c0_i32 = arith.constant 0 : i32
    %c0_i32_0 = arith.constant 0 : i32
    %c0_i32_1 = arith.constant 0 : i32
    %c0_i32_2 = arith.constant 0 : i32
    return %c0_i32, %c0_i32_0, %c0_i32_1 : i32, i32, i32
  }
  func.func @transform_6(%arg0: i32) -> (i32, i32) {
    %c0_i32 = arith.constant 0 : i32
    %c0_i32_0 = arith.constant 0 : i32
    %c0_i32_1 = arith.constant 0 : i32
    return %c0_i32, %c0_i32_0 : i32, i32
  }
  func.func @transform_7(%arg0: i32) -> (i32, i32) {
    %c0_i32 = arith.constant 0 : i32
    %c0_i32_0 = arith.constant 0 : i32
    %c0_i32_1 = arith.constant 0 : i32
    return %c0_i32, %c0_i32_0 : i32, i32
  }
  func.func @transform_8(%arg0: i32) -> (i32, i32) {
    %c0_i32 = arith.constant 0 : i32
    %c0_i32_0 = arith.constant 0 : i32
    %c0_i32_1 = arith.constant 0 : i32
    return %c0_i32, %c0_i32_0 : i32, i32
  }
  func.func @transform_9(%arg0: i32) -> (i32, i32) {
    %c0_i32 = arith.constant 0 : i32
    %c0_i32_0 = arith.constant 0 : i32
    %c0_i32_1 = arith.constant 0 : i32
    return %c0_i32, %c0_i32_0 : i32, i32
  }
  func.func @transform_10(%arg0: i32) -> (i32, i32) {
    %c0_i32 = arith.constant 0 : i32
    %c0_i32_0 = arith.constant 0 : i32
    %c0_i32_1 = arith.constant 0 : i32
    return %c0_i32, %c0_i32_0 : i32, i32
  }
  func.func @transform_11(%arg0: i32) -> (i32, i32) {
    %c0_i32 = arith.constant 0 : i32
    %c0_i32_0 = arith.constant 0 : i32
    return %arg0, %c0_i32 : i32, i32
  }
}

</mosaic_0001>

<llo_original>
// kernel: servernet_forward.1
$region0: #{servernet_forward.1}
  #allocation0 [shape = 'u32[]', space=smem, size = 0x4, offset = 0x4, fixed_abs, tag = 'smem constant byte address 0x4 - core index']
  #allocation1 [shape = 'u32[72,128]{1,0:T(1,128)}', space=vmem, size = 0x9000, scoped, tag = 'internal scratch']
  #allocation2 [shape = 'bf16[224,128]{1,0:T(8,128)(2,1)}', space=vmem, size = 0xe000, scoped, tag = 'scratch operand']
  #allocation3 [shape = 'f32[16,384]{1,0:T(8,128)}', space=vmem, size = 0x6000, scoped, tag = 'scratch operand']
  %s0 = inlined_call_operand.vmem [shape: f32[16,256], index: 0, kind: input, shape index: {}]
  %s1 = inlined_call_operand.hbm [shape: bf16[256,128], index: 1, kind: input, shape index: {}]
  %s2 = inlined_call_operand.vmem [shape: f32[1,128], index: 2, kind: input, shape index: {}]
  %s3 = inlined_call_operand.hbm [shape: bf16[128,1792], index: 3, kind: input, shape index: {}]
  %s4 = inlined_call_operand.vmem [shape: f32[1,1792], index: 4, kind: input, shape index: {}]
  %s5 = inlined_call_operand.hbm [shape: bf16[3,128,128], index: 5, kind: input, shape index: {}]
  %s6 = inlined_call_operand.vmem [shape: f32[1,128], index: 6, kind: input, shape index: {}]
  %s7 = inlined_call_operand.hbm [shape: bf16[384,128], index: 7, kind: input, shape index: {}]
  %s8 = inlined_call_operand.vmem [shape: f32[1,128], index: 8, kind: input, shape index: {}]
  %s9 = inlined_call_operand.hbm [shape: bf16[128,128], index: 9, kind: input, shape index: {}]
  %s10 = inlined_call_operand.vmem [shape: f32[1,128], index: 10, kind: input, shape index: {}]
  %s11 = inlined_call_operand.vmem [shape: f32[16,128], index: 11, kind: output, shape index: {}]
  %s12 = sld [smem:[#allocation0]]
  $region74: #{servernet_forward.1} parent=0
    _
  %s14 = ssub.s32 1, %s12
  %s15 = scalar_select 0, %s14, %s12
  $region1: #{servernet_forward.1} parent=0
    #allocation4 [shape = 'u8[65536]{0}', space=vmem, size = 0x10000, scoped, tag = 'input window, operand 1, single buffered']
    #allocation5 [shape = 's32[1]{0}', space=sflag, size = 0x4, scoped, tag = 'scoped memory for servernet_forward.1']
    #allocation6 [shape = 'u8[458752]{0}', space=vmem, size = 0x70000, scoped, tag = 'input window, operand 3, single buffered']
    #allocation7 [shape = 's32[1]{0}', space=sflag, size = 0x4, scoped, tag = 'scoped memory for servernet_forward.1']
    #allocation8 [shape = 'u8[98304]{0}', space=vmem, size = 0x18000, scoped, tag = 'input window, operand 5, single buffered']
    #allocation9 [shape = 'u8[98304]{0}', space=vmem, size = 0x18000, scoped, tag = 'input window, operand 7, single buffered']
    #allocation10 [shape = 's32[1]{0}', space=sflag, size = 0x4, scoped, tag = 'scoped memory for servernet_forward.1']
    #allocation11 [shape = 'u8[32768]{0}', space=vmem, size = 0x8000, scoped, tag = 'input window, operand 9, single buffered']
    %16 = vsyncpa [#allocation5], 0
    %17 = vsyncpa [#allocation7], 0
    %18 = vsyncpa [#allocation10], 0
    // Predicated region
    $region2: #{servernet_forward.1} parent=1 // pred_check
      _
    $region3: #{servernet_forward.1} parent=1 // pred_check_branch
      %20 = sbr.rel (0) target = $region5
    $region4: #{servernet_forward.1} parent=1 // pred_region
      _
    $region5: #{servernet_forward.1} parent=1 // pred_fallthru
      _
    // Predicated region
    $region6: #{servernet_forward.1} parent=1 // pred_check
      _
    $region7: #{servernet_forward.1} parent=1 // pred_check_branch
      %22 = sbr.rel (0) target = $region9
    $region8: #{servernet_forward.1} parent=1 // pred_region
      %24 = vsyncadd [#allocation5], 0
      %s25 = sshll.u32 %s1, 4
      %s26 = int_to_ptr.hbm [resolvable:$true] %s25
      %s27 = sshll.u32 [#allocation4], 4
      %s28 = int_to_ptr.vmem [resolvable:$true] %s27
      %33 = dma.hbm_to_vmem [thread:$0]  %s26, 2048, %s28, [#allocation5], 64, 64, 4
    $region9: #{servernet_forward.1} parent=1 // pred_fallthru
      _
    // Predicated region
    $region10: #{servernet_forward.1} parent=1 // pred_check
      _
    $region11: #{servernet_forward.1} parent=1 // pred_check_branch
      %35 = sbr.rel (0) target = $region13
    $region12: #{servernet_forward.1} parent=1 // pred_region
      _
    $region13: #{servernet_forward.1} parent=1 // pred_fallthru
      _
    // Predicated region
    $region14: #{servernet_forward.1} parent=1 // pred_check
      _
    $region15: #{servernet_forward.1} parent=1 // pred_check_branch
      %37 = sbr.rel (0) target = $region17
    $region16: #{servernet_forward.1} parent=1 // pred_region
      %39 = vsyncadd [#allocation7], 0
      %s40 = sshll.u32 %s3, 4
      %s41 = int_to_ptr.hbm [resolvable:$true] %s40
      %s42 = sshll.u32 [#allocation6], 4
      %s43 = int_to_ptr.vmem [resolvable:$true] %s42
      %48 = dma.hbm_to_vmem [thread:$0]  %s41, 14336, %s43, [#allocation7], 896, 896, 56
    $region17: #{servernet_forward.1} parent=1 // pred_fallthru
      _
    // Predicated region
    $region18: #{servernet_forward.1} parent=1 // pred_check
      _
    $region19: #{servernet_forward.1} parent=1 // pred_check_branch
      %50 = sbr.rel (0) target = $region21
    $region20: #{servernet_forward.1} parent=1 // pred_region
      _
    $region21: #{servernet_forward.1} parent=1 // pred_fallthru
      _
    // Predicated region
    $region22: #{servernet_forward.1} parent=1 // pred_check
      _
    $region23: #{servernet_forward.1} parent=1 // pred_check_branch
      %52 = sbr.rel (0) target = $region25
    $region24: #{servernet_forward.1} parent=1 // pred_region
      %54 = vsyncadd [#allocation7], 0
      %s55 = sshll.u32 %s5, 4
      %s56 = int_to_ptr.hbm [resolvable:$true] %s55
      %s57 = sshll.u32 [#allocation8], 4
      %s58 = int_to_ptr.vmem [resolvable:$true] %s57
      %63 = dma.hbm_to_vmem [thread:$0]  %s56, 3072, %s58, [#allocation7], 64, 64, 4
    $region25: #{servernet_forward.1} parent=1 // pred_fallthru
      _
    // Predicated region
    $region26: #{servernet_forward.1} parent=1 // pred_check
      _
    $region27: #{servernet_forward.1} parent=1 // pred_check_branch
      %65 = sbr.rel (0) target = $region29
    $region28: #{servernet_forward.1} parent=1 // pred_region
      _
    $region29: #{servernet_forward.1} parent=1 // pred_fallthru
      _
    // Predicated region
    $region30: #{servernet_forward.1} parent=1 // pred_check
      _
    $region31: #{servernet_forward.1} parent=1 // pred_check_branch
      %67 = sbr.rel (0) target = $region33
    $region32: #{servernet_forward.1} parent=1 // pred_region
      %69 = vsyncadd [#allocation10], 0
      %s70 = sshll.u32 %s7, 4
      %s71 = int_to_ptr.hbm [resolvable:$true] %s70
      %s72 = sshll.u32 [#allocation9], 4
      %s73 = int_to_ptr.vmem [resolvable:$true] %s72
      %78 = dma.hbm_to_vmem [thread:$0]  %s71, 3072, %s73, [#allocation10], 64, 64, 4
    $region33: #{servernet_forward.1} parent=1 // pred_fallthru
      _
    // Predicated region
    $region34: #{servernet_forward.1} parent=1 // pred_check
      _
    $region35: #{servernet_forward.1} parent=1 // pred_check_branch
      %80 = sbr.rel (0) target = $region37
    $region36: #{servernet_forward.1} parent=1 // pred_region
      _
    $region37: #{servernet_forward.1} parent=1 // pred_fallthru
      _
    // Predicated region
    $region38: #{servernet_forward.1} parent=1 // pred_check
      _
    $region39: #{servernet_forward.1} parent=1 // pred_check_branch
      %82 = sbr.rel (0) target = $region41
    $region40: #{servernet_forward.1} parent=1 // pred_region
      %84 = vsyncadd [#allocation10], 0
      %s85 = sshll.u32 %s9, 4
      %s86 = int_to_ptr.hbm [resolvable:$true] %s85
      %s87 = sshll.u32 [#allocation11], 4
      %s88 = int_to_ptr.vmem [resolvable:$true] %s87
      %93 = dma.hbm_to_vmem [thread:$0]  %s86, 1024, %s88, [#allocation10], 64, 64, 4
    $region41: #{servernet_forward.1} parent=1 // pred_fallthru
      _
    // Predicated region
    $region42: #{servernet_forward.1} parent=1 // pred_check
      _
    $region43: #{servernet_forward.1} parent=1 // pred_check_branch
      %95 = sbr.rel (0) target = $region45
    $region44: #{servernet_forward.1} parent=1 // pred_region
      _
    $region45: #{servernet_forward.1} parent=1 // pred_fallthru
      _
    // Predicated region
    $region46: #{servernet_forward.1} parent=1 // pred_check
      _
    $region47: #{servernet_forward.1} parent=1 // pred_check_branch
      %97 = sbr.rel (0) target = $region49
    $region48: #{servernet_forward.1} parent=1 // pred_region
      %99 = dma.done [#allocation5], 2048
    $region49: #{servernet_forward.1} parent=1 // pred_fallthru
      _
    // Predicated region
    $region50: #{servernet_forward.1} parent=1 // pred_check
      _
    $region51: #{servernet_forward.1} parent=1 // pred_check_branch
      %101 = sbr.rel (0) target = $region53
    $region52: #{servernet_forward.1} parent=1 // pred_region
      %103 = dma.done [#allocation7], 14336
    $region53: #{servernet_forward.1} parent=1 // pred_fallthru
      _
    // Predicated region
    $region54: #{servernet_forward.1} parent=1 // pred_check
      _
    $region55: #{servernet_forward.1} parent=1 // pred_check_branch
      %105 = sbr.rel (0) target = $region57
    $region56: #{servernet_forward.1} parent=1 // pred_region
      %107 = dma.done [#allocation7], 3072
    $region57: #{servernet_forward.1} parent=1 // pred_fallthru
      _
    // Predicated region
    $region58: #{servernet_forward.1} parent=1 // pred_check
      _
    $region59: #{servernet_forward.1} parent=1 // pred_check_branch
      %109 = sbr.rel (0) target = $region61
    $region60: #{servernet_forward.1} parent=1 // pred_region
      %111 = dma.done [#allocation10], 3072
    $region61: #{servernet_forward.1} parent=1 // pred_fallthru
      _
    // Predicated region
    $region62: #{servernet_forward.1} parent=1 // pred_check
      _
    $region63: #{servernet_forward.1} parent=1 // pred_check_branch
      %113 = sbr.rel (0) target = $region65
    $region64: #{servernet_forward.1} parent=1 // pred_region
      %115 = dma.done [#allocation10], 1024
    $region65: #{servernet_forward.1} parent=1 // pred_fallthru
      _
    %v116 = vld [vmem:[%s0] sm:$0xff]
    %v117 = vld [vmem:[%s0 + $0x8] sm:$0xff]
    %v118 = vld [vmem:[%s0 + $0x10] sm:$0xff]
    %v119 = vld [vmem:[%s0 + $0x18] sm:$0xff]
    %v120 = vpack.c.bf16 %v118, %v116
    %v121 = vpack.c.bf16 %v119, %v117
    %v122 = vld [vmem:[#allocation4] sm:$0xf]
    %v123 = vld [vmem:[#allocation4 + $0x4] sm:$0xf]
    %v124 = vld [vmem:[#allocation4 + $0x8] sm:$0xf]
    %v125 = vld [vmem:[#allocation4 + $0xc] sm:$0xf]
    %v126 = vld [vmem:[#allocation4 + $0x10] sm:$0xf]
    %v127 = vld [vmem:[#allocation4 + $0x14] sm:$0xf]
    %v128 = vld [vmem:[#allocation4 + $0x18] sm:$0xf]
    %v129 = vld [vmem:[#allocation4 + $0x1c] sm:$0xf]
    %v130 = vld [vmem:[#allocation4 + $0x20] sm:$0xf]
    %v131 = vld [vmem:[#allocation4 + $0x24] sm:$0xf]
    %v132 = vld [vmem:[#allocation4 + $0x28] sm:$0xf]
    %v133 = vld [vmem:[#allocation4 + $0x2c] sm:$0xf]
    %v134 = vld [vmem:[#allocation4 + $0x30] sm:$0xf]
    %v135 = vld [vmem:[#allocation4 + $0x34] sm:$0xf]
    %v136 = vld [vmem:[#allocation4 + $0x38] sm:$0xf]
    %v137 = vld [vmem:[#allocation4 + $0x3c] sm:$0xf]
    %v138 = vld [vmem:[#allocation4 + $0x40] sm:$0xf]
    %v139 = vld [vmem:[#allocation4 + $0x44] sm:$0xf]
    %v140 = vld [vmem:[#allocation4 + $0x48] sm:$0xf]
    %v141 = vld [vmem:[#allocation4 + $0x4c] sm:$0xf]
    %v142 = vld [vmem:[#allocation4 + $0x50] sm:$0xf]
    %v143 = vld [vmem:[#allocation4 + $0x54] sm:$0xf]
    %v144 = vld [vmem:[#allocation4 + $0x58] sm:$0xf]
    %v145 = vld [vmem:[#allocation4 + $0x5c] sm:$0xf]
    %v146 = vld [vmem:[#allocation4 + $0x60] sm:$0xf]
    %v147 = vld [vmem:[#allocation4 + $0x64] sm:$0xf]
    %v148 = vld [vmem:[#allocation4 + $0x68] sm:$0xf]
    %v149 = vld [vmem:[#allocation4 + $0x6c] sm:$0xf]
    %v150 = vld [vmem:[#allocation4 + $0x70] sm:$0xf]
    %v151 = vld [vmem:[#allocation4 + $0x74] sm:$0xf]
    %v152 = vld [vmem:[#allocation4 + $0x78] sm:$0xf]
    %v153 = vld [vmem:[#allocation4 + $0x7c] sm:$0xf]
    %v154 = vld [vmem:[%s2] sm:$0x1]
    %v156 = vperm.slane %v154, 0
    %v190 = vunpack.c.l.b16 %v122
    %v191 = vunpack.c.l.b16 %v123
    %v192 = vunpack.c.l.b16 %v124
    %v193 = vunpack.c.l.b16 %v125
    %v194 = vunpack.c.l.b16 %v126
    %v195 = vunpack.c.l.b16 %v127
    %v196 = vunpack.c.l.b16 %v128
    %v197 = vunpack.c.l.b16 %v129
    %v198 = vunpack.c.l.b16 %v130
    %v199 = vunpack.c.l.b16 %v131
    %v200 = vunpack.c.l.b16 %v132
    %v201 = vunpack.c.l.b16 %v133
    %v202 = vunpack.c.l.b16 %v134
    %v203 = vunpack.c.l.b16 %v135
    %v204 = vunpack.c.l.b16 %v136
    %v205 = vunpack.c.l.b16 %v137
    %v206 = vunpack.c.l.b16 %v138
    %v207 = vunpack.c.l.b16 %v139
    %v208 = vunpack.c.l.b16 %v140
    %v209 = vunpack.c.l.b16 %v141
    %v210 = vunpack.c.l.b16 %v142
    %v211 = vunpack.c.l.b16 %v143
    %v212 = vunpack.c.l.b16 %v144
    %v213 = vunpack.c.l.b16 %v145
    %v214 = vunpack.c.l.b16 %v146
    %v215 = vunpack.c.l.b16 %v147
    %v216 = vunpack.c.l.b16 %v148
    %v217 = vunpack.c.l.b16 %v149
    %v218 = vunpack.c.l.b16 %v150
    %v219 = vunpack.c.l.b16 %v151
    %v220 = vunpack.c.l.b16 %v152
    %v221 = vunpack.c.l.b16 %v153
    %v222 = vpack.c.b16 %v191, %v190
    %v223 = vpack.c.b16 %v193, %v192
    %v224 = vpack.c.b16 %v195, %v194
    %v225 = vpack.c.b16 %v197, %v196
    %v226 = vpack.c.b16 %v199, %v198
    %v227 = vpack.c.b16 %v201, %v200
    %v228 = vpack.c.b16 %v203, %v202
    %v229 = vpack.c.b16 %v205, %v204
    %v230 = vpack.c.b16 %v207, %v206
    %v231 = vpack.c.b16 %v209, %v208
    %v232 = vpack.c.b16 %v211, %v210
    %v233 = vpack.c.b16 %v213, %v212
    %v234 = vpack.c.b16 %v215, %v214
    %v235 = vpack.c.b16 %v217, %v216
    %v236 = vpack.c.b16 %v219, %v218
    %v237 = vpack.c.b16 %v221, %v220
    %254 = vmatpush.bf16.msra.mxu0 %v229
    %255 = vmatpush.bf16.msra.mxu0 %v228
    %256 = vmatpush.bf16.msra.mxu0 %v227
    %257 = vmatpush.bf16.msra.mxu0 %v226
    %258 = vmatpush.bf16.msra.mxu0 %v225
    %259 = vmatpush.bf16.msra.mxu0 %v224
    %260 = vmatpush.bf16.msra.mxu0 %v223
    %261 = vmatpush.bf16.msra.mxu0 %v222
    %262 = vmatmul.bf16.gmra.mxu0 %v120
    %v263 = vpop.f32.mrf.mxu0
    %v264 = vadd.f32 %v156, %v263
    %v265 = vpop.f32.mrf.mxu0
    %v266 = vadd.f32 %v156, %v265
    %267 = vdwg.mxu0
    %268 = vmatpush.bf16.msra.mxu0 %v237
    %269 = vmatpush.bf16.msra.mxu0 %v236
    %270 = vmatpush.bf16.msra.mxu0 %v235
    %271 = vmatpush.bf16.msra.mxu0 %v234
    %272 = vmatpush.bf16.msra.mxu0 %v233
    %273 = vmatpush.bf16.msra.mxu0 %v232
    %274 = vmatpush.bf16.msra.mxu0 %v231
    %275 = vmatpush.bf16.msra.mxu0 %v230
    %276 = vmatmul.bf16.gmra.mxu0 %v121
    %v277 = vpop.f32.mrf.mxu0
    %v278 = vadd.f32 %v264, %v277
    %v279 = vpop.f32.mrf.mxu0
    %v280 = vadd.f32 %v266, %v279
    %281 = vdwg.mxu0
    %v282 = vmax.f32 %v278, 0.0
    %v283 = vmax.f32 %v280, 0.0
    %v284 = vpack.c.bf16 %v283, %v282
    %v285 = vld [vmem:[#allocation6] sm:$0xff]
    %v286 = vld [vmem:[#allocation6 + $0x8] sm:$0xff]
    %v287 = vld [vmem:[#allocation6 + $0x10] sm:$0xff]
    %v288 = vld [vmem:[#allocation6 + $0x18] sm:$0xff]
    %v289 = vld [vmem:[#allocation6 + $0x20] sm:$0xff]
    %v290 = vld [vmem:[#allocation6 + $0x28] sm:$0xff]
    %v291 = vld [vmem:[#allocation6 + $0x30] sm:$0xff]
    %v292 = vld [vmem:[#allocation6 + $0x38] sm:$0xff]
    %v293 = vld [vmem:[#allocation6 + $0x40] sm:$0xff]
    %v294 = vld [vmem:[#allocation6 + $0x48] sm:$0xff]
    %v295 = vld [vmem:[#allocation6 + $0x50] sm:$0xff]
    %v296 = vld [vmem:[#allocation6 + $0x58] sm:$0xff]
    %v297 = vld [vmem:[#allocation6 + $0x60] sm:$0xff]
    %v298 = vld [vmem:[#allocation6 + $0x68] sm:$0xff]
    %v299 = vld [vmem:[#allocation6 + $0x70] sm:$0xff]
    %v300 = vld [vmem:[#allocation6 + $0x78] sm:$0xff]
    %v301 = vld [vmem:[#allocation6 + $0x80] sm:$0xff]
    %v302 = vld [vmem:[#allocation6 + $0x88] sm:$0xff]
    %v303 = vld [vmem:[#allocation6 + $0x90] sm:$0xff]
    %v304 = vld [vmem:[#allocation6 + $0x98] sm:$0xff]
    %v305 = vld [vmem:[#allocation6 + $0xa0] sm:$0xff]
    %v306 = vld [vmem:[#allocation6 + $0xa8] sm:$0xff]
    %v307 = vld [vmem:[#allocation6 + $0xb0] sm:$0xff]
    %v308 = vld [vmem:[#allocation6 + $0xb8] sm:$0xff]
    %v309 = vld [vmem:[#allocation6 + $0xc0] sm:$0xff]
    %v310 = vld [vmem:[#allocation6 + $0xc8] sm:$0xff]
    %v311 = vld [vmem:[#allocation6 + $0xd0] sm:$0xff]
    %v312 = vld [vmem:[#allocation6 + $0xd8] sm:$0xff]
    %v313 = vld [vmem:[#allocation6 + $0xe0] sm:$0xff]
    %v314 = vld [vmem:[#allocation6 + $0xe8] sm:$0xff]
    %v315 = vld [vmem:[#allocation6 + $0xf0] sm:$0xff]
    %v316 = vld [vmem:[#allocation6 + $0xf8] sm:$0xff]
    %v317 = vld [vmem:[#allocation6 + $0x100] sm:$0xff]
    %v318 = vld [vmem:[#allocation6 + $0x108] sm:$0xff]
    %v319 = vld [vmem:[#allocation6 + $0x110] sm:$0xff]
    %v320 = vld [vmem:[#allocation6 + $0x118] sm:$0xff]
    %v321 = vld [vmem:[#allocation6 + $0x120] sm:$0xff]
    %v322 = vld [vmem:[#allocation6 + $0x128] sm:$0xff]
    %v323 = vld [vmem:[#allocation6 + $0x130] sm:$0xff]
    %v324 = vld [vmem:[#allocation6 + $0x138] sm:$0xff]
    %v325 = vld [vmem:[#allocation6 + $0x140] sm:$0xff]
    %v326 = vld [vmem:[#allocation6 + $0x148] sm:$0xff]
    %v327 = vld [vmem:[#allocation6 + $0x150] sm:$0xff]
    %v328 = vld [vmem:[#allocation6 + $0x158] sm:$0xff]
    %v329 = vld [vmem:[#allocation6 + $0x160] sm:$0xff]
    %v330 = vld [vmem:[#allocation6 + $0x168] sm:$0xff]
    %v331 = vld [vmem:[#allocation6 + $0x170] sm:$0xff]
    %v332 = vld [vmem:[#allocation6 + $0x178] sm:$0xff]
    %v333 = vld [vmem:[#allocation6 + $0x180] sm:$0xff]
    %v334 = vld [vmem:[#allocation6 + $0x188] sm:$0xff]
    %v335 = vld [vmem:[#allocation6 + $0x190] sm:$0xff]
    %v336 = vld [vmem:[#allocation6 + $0x198] sm:$0xff]
    %v337 = vld [vmem:[#allocation6 + $0x1a0] sm:$0xff]
    %v338 = vld [vmem:[#allocation6 + $0x1a8] sm:$0xff]
    %v339 = vld [vmem:[#allocation6 + $0x1b0] sm:$0xff]
    %v340 = vld [vmem:[#allocation6 + $0x1b8] sm:$0xff]
    %v341 = vld [vmem:[#allocation6 + $0x1c0] sm:$0xff]
    %v342 = vld [vmem:[#allocation6 + $0x1c8] sm:$0xff]
    %v343 = vld [vmem:[#allocation6 + $0x1d0] sm:$0xff]
    %v344 = vld [vmem:[#allocation6 + $0x1d8] sm:$0xff]
    %v345 = vld [vmem:[#allocation6 + $0x1e0] sm:$0xff]
    %v346 = vld [vmem:[#allocation6 + $0x1e8] sm:$0xff]
    %v347 = vld [vmem:[#allocation6 + $0x1f0] sm:$0xff]
    %v348 = vld [vmem:[#allocation6 + $0x1f8] sm:$0xff]
    %v349 = vld [vmem:[#allocation6 + $0x200] sm:$0xff]
    %v350 = vld [vmem:[#allocation6 + $0x208] sm:$0xff]
    %v351 = vld [vmem:[#allocation6 + $0x210] sm:$0xff]
    %v352 = vld [vmem:[#allocation6 + $0x218] sm:$0xff]
    %v353 = vld [vmem:[#allocation6 + $0x220] sm:$0xff]
    %v354 = vld [vmem:[#allocation6 + $0x228] sm:$0xff]
    %v355 = vld [vmem:[#allocation6 + $0x230] sm:$0xff]
    %v356 = vld [vmem:[#allocation6 + $0x238] sm:$0xff]
    %v357 = vld [vmem:[#allocation6 + $0x240] sm:$0xff]
    %v358 = vld [vmem:[#allocation6 + $0x248] sm:$0xff]
    %v359 = vld [vmem:[#allocation6 + $0x250] sm:$0xff]
    %v360 = vld [vmem:[#allocation6 + $0x258] sm:$0xff]
    %v361 = vld [vmem:[#allocation6 + $0x260] sm:$0xff]
    %v362 = vld [vmem:[#allocation6 + $0x268] sm:$0xff]
    %v363 = vld [vmem:[#allocation6 + $0x270] sm:$0xff]
    %v364 = vld [vmem:[#allocation6 + $0x278] sm:$0xff]
    %v365 = vld [vmem:[#allocation6 + $0x280] sm:$0xff]
    %v366 = vld [vmem:[#allocation6 + $0x288] sm:$0xff]
    %v367 = vld [vmem:[#allocation6 + $0x290] sm:$0xff]
    %v368 = vld [vmem:[#allocation6 + $0x298] sm:$0xff]
    %v369 = vld [vmem:[#allocation6 + $0x2a0] sm:$0xff]
    %v370 = vld [vmem:[#allocation6 + $0x2a8] sm:$0xff]
    %v371 = vld [vmem:[#allocation6 + $0x2b0] sm:$0xff]
    %v372 = vld [vmem:[#allocation6 + $0x2b8] sm:$0xff]
    %v373 = vld [vmem:[#allocation6 + $0x2c0] sm:$0xff]
    %v374 = vld [vmem:[#allocation6 + $0x2c8] sm:$0xff]
    %v375 = vld [vmem:[#allocation6 + $0x2d0] sm:$0xff]
    %v376 = vld [vmem:[#allocation6 + $0x2d8] sm:$0xff]
    %v377 = vld [vmem:[#allocation6 + $0x2e0] sm:$0xff]
    %v378 = vld [vmem:[#allocation6 + $0x2e8] sm:$0xff]
    %v379 = vld [vmem:[#allocation6 + $0x2f0] sm:$0xff]
    %v380 = vld [vmem:[#allocation6 + $0x2f8] sm:$0xff]
    %v381 = vld [vmem:[#allocation6 + $0x300] sm:$0xff]
    %v382 = vld [vmem:[#allocation6 + $0x308] sm:$0xff]
    %v383 = vld [vmem:[#allocation6 + $0x310] sm:$0xff]
    %v384 = vld [vmem:[#allocation6 + $0x318] sm:$0xff]
    %v385 = vld [vmem:[#allocation6 + $0x320] sm:$0xff]
    %v386 = vld [vmem:[#allocation6 + $0x328] sm:$0xff]
    %v387 = vld [vmem:[#allocation6 + $0x330] sm:$0xff]
    %v388 = vld [vmem:[#allocation6 + $0x338] sm:$0xff]
    %v389 = vld [vmem:[#allocation6 + $0x340] sm:$0xff]
    %v390 = vld [vmem:[#allocation6 + $0x348] sm:$0xff]
    %v391 = vld [vmem:[#allocation6 + $0x350] sm:$0xff]
    %v392 = vld [vmem:[#allocation6 + $0x358] sm:$0xff]
    %v393 = vld [vmem:[#allocation6 + $0x360] sm:$0xff]
    %v394 = vld [vmem:[#allocation6 + $0x368] sm:$0xff]
    %v395 = vld [vmem:[#allocation6 + $0x370] sm:$0xff]
    %v396 = vld [vmem:[#allocation6 + $0x378] sm:$0xff]
    %v397 = vld [vmem:[%s4] sm:$0xff]
    %v398 = vld [vmem:[%s4 + $0x8] sm:$0x3f]
    %v401 = vperm.slane %v397, 0
    %v402 = vperm.slane %v397, 1
    %v403 = vperm.slane %v397, 2
    %v404 = vperm.slane %v397, 3
    %v405 = vperm.slane %v397, 4
    %v406 = vperm.slane %v397, 5
    %v407 = vperm.slane %v397, 6
    %v408 = vperm.slane %v397, 7
    %v409 = vperm.slane %v398, 0
    %v410 = vperm.slane %v398, 1
    %v411 = vperm.slane %v398, 2
    %v412 = vperm.slane %v398, 3
    %v413 = vperm.slane %v398, 4
    %v414 = vperm.slane %v398, 5
    %v541 = vunpack.c.l.b16 %v285
    %v542 = vunpack.c.h.b16 %v285
    %v543 = vunpack.c.l.b16 %v286
    %v544 = vunpack.c.h.b16 %v286
    %v545 = vunpack.c.l.b16 %v287
    %v546 = vunpack.c.h.b16 %v287
    %v547 = vunpack.c.l.b16 %v288
    %v548 = vunpack.c.h.b16 %v288
    %v549 = vunpack.c.l.b16 %v289
    %v550 = vunpack.c.h.b16 %v289
    %v551 = vunpack.c.l.b16 %v290
    %v552 = vunpack.c.h.b16 %v290
    %v553 = vunpack.c.l.b16 %v291
    %v554 = vunpack.c.h.b16 %v291
    %v555 = vunpack.c.l.b16 %v292
    %v556 = vunpack.c.h.b16 %v292
    %v557 = vunpack.c.l.b16 %v293
    %v558 = vunpack.c.h.b16 %v293
    %v559 = vunpack.c.l.b16 %v294
    %v560 = vunpack.c.h.b16 %v294
    %v561 = vunpack.c.l.b16 %v295
    %v562 = vunpack.c.h.b16 %v295
    %v563 = vunpack.c.l.b16 %v296
    %v564 = vunpack.c.h.b16 %v296
    %v565 = vunpack.c.l.b16 %v297
    %v566 = vunpack.c.h.b16 %v297
    %v567 = vunpack.c.l.b16 %v298
    %v568 = vunpack.c.h.b16 %v298
    %v569 = vunpack.c.l.b16 %v299
    %v570 = vunpack.c.h.b16 %v299
    %v571 = vunpack.c.l.b16 %v300
    %v572 = vunpack.c.h.b16 %v300
    %v573 = vunpack.c.l.b16 %v301
    %v574 = vunpack.c.h.b16 %v301
    %v575 = vunpack.c.l.b16 %v302
    %v576 = vunpack.c.h.b16 %v302
    %v577 = vunpack.c.l.b16 %v303
    %v578 = vunpack.c.h.b16 %v303
    %v579 = vunpack.c.l.b16 %v304
    %v580 = vunpack.c.h.b16 %v304
    %v581 = vunpack.c.l.b16 %v305
    %v582 = vunpack.c.h.b16 %v305
    %v583 = vunpack.c.l.b16 %v306
    %v584 = vunpack.c.h.b16 %v306
    %v585 = vunpack.c.l.b16 %v307
    %v586 = vunpack.c.h.b16 %v307
    %v587 = vunpack.c.l.b16 %v308
    %v588 = vunpack.c.h.b16 %v308
    %v589 = vunpack.c.l.b16 %v309
    %v590 = vunpack.c.h.b16 %v309
    %v591 = vunpack.c.l.b16 %v310
    %v592 = vunpack.c.h.b16 %v310
    %v593 = vunpack.c.l.b16 %v311
    %v594 = vunpack.c.h.b16 %v311
    %v595 = vunpack.c.l.b16 %v312
    %v596 = vunpack.c.h.b16 %v312
    %v597 = vunpack.c.l.b16 %v313
    %v598 = vunpack.c.h.b16 %v313
    %v599 = vunpack.c.l.b16 %v314
    %v600 = vunpack.c.h.b16 %v314
    %v601 = vunpack.c.l.b16 %v315
    %v602 = vunpack.c.h.b16 %v315
    %v603 = vunpack.c.l.b16 %v316
    %v604 = vunpack.c.h.b16 %v316
    %v605 = vunpack.c.l.b16 %v317
    %v606 = vunpack.c.h.b16 %v317
    %v607 = vunpack.c.l.b16 %v318
    %v608 = vunpack.c.h.b16 %v318
    %v609 = vunpack.c.l.b16 %v319
    %v610 = vunpack.c.h.b16 %v319
    %v611 = vunpack.c.l.b16 %v320
    %v612 = vunpack.c.h.b16 %v320
    %v613 = vunpack.c.l.b16 %v321
    %v614 = vunpack.c.h.b16 %v321
    %v615 = vunpack.c.l.b16 %v322
    %v616 = vunpack.c.h.b16 %v322
    %v617 = vunpack.c.l.b16 %v323
    %v618 = vunpack.c.h.b16 %v323
    %v619 = vunpack.c.l.b16 %v324
    %v620 = vunpack.c.h.b16 %v324
    %v621 = vunpack.c.l.b16 %v325
    %v622 = vunpack.c.h.b16 %v325
    %v623 = vunpack.c.l.b16 %v326
    %v624 = vunpack.c.h.b16 %v326
    %v625 = vunpack.c.l.b16 %v327
    %v626 = vunpack.c.h.b16 %v327
    %v627 = vunpack.c.l.b16 %v328
    %v628 = vunpack.c.h.b16 %v328
    %v629 = vunpack.c.l.b16 %v329
    %v630 = vunpack.c.h.b16 %v329
    %v631 = vunpack.c.l.b16 %v330
    %v632 = vunpack.c.h.b16 %v330
    %v633 = vunpack.c.l.b16 %v331
    %v634 = vunpack.c.h.b16 %v331
    %v635 = vunpack.c.l.b16 %v332
    %v636 = vunpack.c.h.b16 %v332
    %v637 = vunpack.c.l.b16 %v333
    %v638 = vunpack.c.h.b16 %v333
    %v639 = vunpack.c.l.b16 %v334
    %v640 = vunpack.c.h.b16 %v334
    %v641 = vunpack.c.l.b16 %v335
    %v642 = vunpack.c.h.b16 %v335
    %v643 = vunpack.c.l.b16 %v336
    %v644 = vunpack.c.h.b16 %v336
    %v645 = vunpack.c.l.b16 %v337
    %v646 = vunpack.c.h.b16 %v337
    %v647 = vunpack.c.l.b16 %v338
    %v648 = vunpack.c.h.b16 %v338
    %v649 = vunpack.c.l.b16 %v339
    %v650 = vunpack.c.h.b16 %v339
    %v651 = vunpack.c.l.b16 %v340
    %v652 = vunpack.c.h.b16 %v340
    %v653 = vunpack.c.l.b16 %v341
    %v654 = vunpack.c.h.b16 %v341
    %v655 = vunpack.c.l.b16 %v342
    %v656 = vunpack.c.h.b16 %v342
    %v657 = vunpack.c.l.b16 %v343
    %v658 = vunpack.c.h.b16 %v343
    %v659 = vunpack.c.l.b16 %v344
    %v660 = vunpack.c.h.b16 %v344
    %v661 = vunpack.c.l.b16 %v345
    %v662 = vunpack.c.h.b16 %v345
    %v663 = vunpack.c.l.b16 %v346
    %v664 = vunpack.c.h.b16 %v346
    %v665 = vunpack.c.l.b16 %v347
    %v666 = vunpack.c.h.b16 %v347
    %v667 = vunpack.c.l.b16 %v348
    %v668 = vunpack.c.h.b16 %v348
    %v669 = vunpack.c.l.b16 %v349
    %v670 = vunpack.c.h.b16 %v349
    %v671 = vunpack.c.l.b16 %v350
    %v672 = vunpack.c.h.b16 %v350
    %v673 = vunpack.c.l.b16 %v351
    %v674 = vunpack.c.h.b16 %v351
    %v675 = vunpack.c.l.b16 %v352
    %v676 = vunpack.c.h.b16 %v352
    %v677 = vunpack.c.l.b16 %v353
    %v678 = vunpack.c.h.b16 %v353
    %v679 = vunpack.c.l.b16 %v354
    %v680 = vunpack.c.h.b16 %v354
    %v681 = vunpack.c.l.b16 %v355
    %v682 = vunpack.c.h.b16 %v355
    %v683 = vunpack.c.l.b16 %v356
    %v684 = vunpack.c.h.b16 %v356
    %v685 = vunpack.c.l.b16 %v357
    %v686 = vunpack.c.h.b16 %v357
    %v687 = vunpack.c.l.b16 %v358
    %v688 = vunpack.c.h.b16 %v358
    %v689 = vunpack.c.l.b16 %v359
    %v690 = vunpack.c.h.b16 %v359
    %v691 = vunpack.c.l.b16 %v360
    %v692 = vunpack.c.h.b16 %v360
    %v693 = vunpack.c.l.b16 %v361
    %v694 = vunpack.c.h.b16 %v361
    %v695 = vunpack.c.l.b16 %v362
    %v696 = vunpack.c.h.b16 %v362
    %v697 = vunpack.c.l.b16 %v363
    %v698 = vunpack.c.h.b16 %v363
    %v699 = vunpack.c.l.b16 %v364
    %v700 = vunpack.c.h.b16 %v364
    %v701 = vunpack.c.l.b16 %v365
    %v702 = vunpack.c.h.b16 %v365
    %v703 = vunpack.c.l.b16 %v366
    %v704 = vunpack.c.h.b16 %v366
    %v705 = vunpack.c.l.b16 %v367
    %v706 = vunpack.c.h.b16 %v367
    %v707 = vunpack.c.l.b16 %v368
    %v708 = vunpack.c.h.b16 %v368
    %v709 = vunpack.c.l.b16 %v369
    %v710 = vunpack.c.h.b16 %v369
    %v711 = vunpack.c.l.b16 %v370
    %v712 = vunpack.c.h.b16 %v370
    %v713 = vunpack.c.l.b16 %v371
    %v714 = vunpack.c.h.b16 %v371
    %v715 = vunpack.c.l.b16 %v372
    %v716 = vunpack.c.h.b16 %v372
    %v717 = vunpack.c.l.b16 %v373
    %v718 = vunpack.c.h.b16 %v373
    %v719 = vunpack.c.l.b16 %v374
    %v720 = vunpack.c.h.b16 %v374
    %v721 = vunpack.c.l.b16 %v375
    %v722 = vunpack.c.h.b16 %v375
    %v723 = vunpack.c.l.b16 %v376
    %v724 = vunpack.c.h.b16 %v376
    %v725 = vunpack.c.l.b16 %v377
    %v726 = vunpack.c.h.b16 %v377
    %v727 = vunpack.c.l.b16 %v378
    %v728 = vunpack.c.h.b16 %v378
    %v729 = vunpack.c.l.b16 %v379
    %v730 = vunpack.c.h.b16 %v379
    %v731 = vunpack.c.l.b16 %v380
    %v732 = vunpack.c.h.b16 %v380
    %v733 = vunpack.c.l.b16 %v381
    %v734 = vunpack.c.h.b16 %v381
    %v735 = vunpack.c.l.b16 %v382
    %v736 = vunpack.c.h.b16 %v382
    %v737 = vunpack.c.l.b16 %v383
    %v738 = vunpack.c.h.b16 %v383
    %v739 = vunpack.c.l.b16 %v384
    %v740 = vunpack.c.h.b16 %v384
    %v741 = vunpack.c.l.b16 %v385
    %v742 = vunpack.c.h.b16 %v385
    %v743 = vunpack.c.l.b16 %v386
    %v744 = vunpack.c.h.b16 %v386
    %v745 = vunpack.c.l.b16 %v387
    %v746 = vunpack.c.h.b16 %v387
    %v747 = vunpack.c.l.b16 %v388
    %v748 = vunpack.c.h.b16 %v388
    %v749 = vunpack.c.l.b16 %v389
    %v750 = vunpack.c.h.b16 %v389
    %v751 = vunpack.c.l.b16 %v390
    %v752 = vunpack.c.h.b16 %v390
    %v753 = vunpack.c.l.b16 %v391
    %v754 = vunpack.c.h.b16 %v391
    %v755 = vunpack.c.l.b16 %v392
    %v756 = vunpack.c.h.b16 %v392
    %v757 = vunpack.c.l.b16 %v393
    %v758 = vunpack.c.h.b16 %v393
    %v759 = vunpack.c.l.b16 %v394
    %v760 = vunpack.c.h.b16 %v394
    %v761 = vunpack.c.l.b16 %v395
    %v762 = vunpack.c.h.b16 %v395
    %v763 = vunpack.c.l.b16 %v396
    %v764 = vunpack.c.h.b16 %v396
    %v765 = vpack.c.b16 %v555, %v541
    %v766 = vpack.c.b16 %v556, %v542
    %v767 = vpack.c.b16 %v557, %v543
    %v768 = vpack.c.b16 %v558, %v544
    %v769 = vpack.c.b16 %v559, %v545
    %v770 = vpack.c.b16 %v560, %v546
    %v771 = vpack.c.b16 %v561, %v547
    %v772 = vpack.c.b16 %v562, %v548
    %v773 = vpack.c.b16 %v563, %v549
    %v774 = vpack.c.b16 %v564, %v550
    %v775 = vpack.c.b16 %v565, %v551
    %v776 = vpack.c.b16 %v566, %v552
    %v777 = vpack.c.b16 %v567, %v553
    %v778 = vpack.c.b16 %v568, %v554
    %v779 = vpack.c.b16 %v583, %v569
    %v780 = vpack.c.b16 %v584, %v570
    %v781 = vpack.c.b16 %v585, %v571
    %v782 = vpack.c.b16 %v586, %v572
    %v783 = vpack.c.b16 %v587, %v573
    %v784 = vpack.c.b16 %v588, %v574
    %v785 = vpack.c.b16 %v589, %v575
    %v786 = vpack.c.b16 %v590, %v576
    %v787 = vpack.c.b16 %v591, %v577
    %v788 = vpack.c.b16 %v592, %v578
    %v789 = vpack.c.b16 %v593, %v579
    %v790 = vpack.c.b16 %v594, %v580
    %v791 = vpack.c.b16 %v595, %v581
    %v792 = vpack.c.b16 %v596, %v582
    %v793 = vpack.c.b16 %v611, %v597
    %v794 = vpack.c.b16 %v612, %v598
    %v795 = vpack.c.b16 %v613, %v599
    %v796 = vpack.c.b16 %v614, %v600
    %v797 = vpack.c.b16 %v615, %v601
    %v798 = vpack.c.b16 %v616, %v602
    %v799 = vpack.c.b16 %v617, %v603
    %v800 = vpack.c.b16 %v618, %v604
    %v801 = vpack.c.b16 %v619, %v605
    %v802 = vpack.c.b16 %v620, %v606
    %v803 = vpack.c.b16 %v621, %v607
    %v804 = vpack.c.b16 %v622, %v608
    %v805 = vpack.c.b16 %v623, %v609
    %v806 = vpack.c.b16 %v624, %v610
    %v807 = vpack.c.b16 %v639, %v625
    %v808 = vpack.c.b16 %v640, %v626
    %v809 = vpack.c.b16 %v641, %v627
    %v810 = vpack.c.b16 %v642, %v628
    %v811 = vpack.c.b16 %v643, %v629
    %v812 = vpack.c.b16 %v644, %v630
    %v813 = vpack.c.b16 %v645, %v631
    %v814 = vpack.c.b16 %v646, %v632
    %v815 = vpack.c.b16 %v647, %v633
    %v816 = vpack.c.b16 %v648, %v634
    %v817 = vpack.c.b16 %v649, %v635
    %v818 = vpack.c.b16 %v650, %v636
    %v819 = vpack.c.b16 %v651, %v637
    %v820 = vpack.c.b16 %v652, %v638
    %v821 = vpack.c.b16 %v667, %v653
    %v822 = vpack.c.b16 %v668, %v654
    %v823 = vpack.c.b16 %v669, %v655
    %v824 = vpack.c.b16 %v670, %v656
    %v825 = vpack.c.b16 %v671, %v657
    %v826 = vpack.c.b16 %v672, %v658
    %v827 = vpack.c.b16 %v673, %v659
    %v828 = vpack.c.b16 %v674, %v660
    %v829 = vpack.c.b16 %v675, %v661
    %v830 = vpack.c.b16 %v676, %v662
    %v831 = vpack.c.b16 %v677, %v663
    %v832 = vpack.c.b16 %v678, %v664
    %v833 = vpack.c.b16 %v679, %v665
    %v834 = vpack.c.b16 %v680, %v666
    %v835 = vpack.c.b16 %v695, %v681
    %v836 = vpack.c.b16 %v696, %v682
    %v837 = vpack.c.b16 %v697, %v683
    %v838 = vpack.c.b16 %v698, %v684
    %v839 = vpack.c.b16 %v699, %v685
    %v840 = vpack.c.b16 %v700, %v686
    %v841 = vpack.c.b16 %v701, %v687
    %v842 = vpack.c.b16 %v702, %v688
    %v843 = vpack.c.b16 %v703, %v689
    %v844 = vpack.c.b16 %v704, %v690
    %v845 = vpack.c.b16 %v705, %v691
    %v846 = vpack.c.b16 %v706, %v692
    %v847 = vpack.c.b16 %v707, %v693
    %v848 = vpack.c.b16 %v708, %v694
    %v849 = vpack.c.b16 %v723, %v709
    %v850 = vpack.c.b16 %v724, %v710
    %v851 = vpack.c.b16 %v725, %v711
    %v852 = vpack.c.b16 %v726, %v712
    %v853 = vpack.c.b16 %v727, %v713
    %v854 = vpack.c.b16 %v728, %v714
    %v855 = vpack.c.b16 %v729, %v715
    %v856 = vpack.c.b16 %v730, %v716
    %v857 = vpack.c.b16 %v731, %v717
    %v858 = vpack.c.b16 %v732, %v718
    %v859 = vpack.c.b16 %v733, %v719
    %v860 = vpack.c.b16 %v734, %v720
    %v861 = vpack.c.b16 %v735, %v721
    %v862 = vpack.c.b16 %v736, %v722
    %v863 = vpack.c.b16 %v751, %v737
    %v864 = vpack.c.b16 %v752, %v738
    %v865 = vpack.c.b16 %v753, %v739
    %v866 = vpack.c.b16 %v754, %v740
    %v867 = vpack.c.b16 %v755, %v741
    %v868 = vpack.c.b16 %v756, %v742
    %v869 = vpack.c.b16 %v757, %v743
    %v870 = vpack.c.b16 %v758, %v744
    %v871 = vpack.c.b16 %v759, %v745
    %v872 = vpack.c.b16 %v760, %v746
    %v873 = vpack.c.b16 %v761, %v747
    %v874 = vpack.c.b16 %v762, %v748
    %v875 = vpack.c.b16 %v763, %v749
    %v876 = vpack.c.b16 %v764, %v750
    %989 = vmatpush.bf16.msra.mxu0 %v863
    %990 = vmatpush.bf16.msra.mxu0 %v849
    %991 = vmatpush.bf16.msra.mxu0 %v835
    %992 = vmatpush.bf16.msra.mxu0 %v821
    %993 = vmatpush.bf16.msra.mxu0 %v807
    %994 = vmatpush.bf16.msra.mxu0 %v793
    %995 = vmatpush.bf16.msra.mxu0 %v779
    %996 = vmatpush.bf16.msra.mxu0 %v765
    %997 = vmatmul.bf16.gmra.mxu0 %v284
    %v998 = vpop.f32.mrf.mxu0
    %v999 = vadd.f32 %v401, %v998
    %v1000 = vpop.f32.mrf.mxu0
    %v1001 = vadd.f32 %v401, %v1000
    %1002 = vdwg.mxu0
    %1003 = vmatpush.bf16.msra.mxu0 %v864
    %1004 = vmatpush.bf16.msra.mxu0 %v850
    %1005 = vmatpush.bf16.msra.mxu0 %v836
    %1006 = vmatpush.bf16.msra.mxu0 %v822
    %1007 = vmatpush.bf16.msra.mxu0 %v808
    %1008 = vmatpush.bf16.msra.mxu0 %v794
    %1009 = vmatpush.bf16.msra.mxu0 %v780
    %1010 = vmatpush.bf16.msra.mxu0 %v766
    %1011 = vmatmul.bf16.gmra.mxu0 %v284
    %v1012 = vpop.f32.mrf.mxu0
    %v1013 = vadd.f32 %v402, %v1012
    %v1014 = vpop.f32.mrf.mxu0
    %v1015 = vadd.f32 %v402, %v1014
    %1016 = vdwg.mxu0
    %1017 = vmatpush.bf16.msra.mxu0 %v865
    %1018 = vmatpush.bf16.msra.mxu0 %v851
    %1019 = vmatpush.bf16.msra.mxu0 %v837
    %1020 = vmatpush.bf16.msra.mxu0 %v823
    %1021 = vmatpush.bf16.msra.mxu0 %v809
    %1022 = vmatpush.bf16.msra.mxu0 %v795
    %1023 = vmatpush.bf16.msra.mxu0 %v781
    %1024 = vmatpush.bf16.msra.mxu0 %v767
    %1025 = vmatmul.bf16.gmra.mxu0 %v284
    %v1026 = vpop.f32.mrf.mxu0
    %v1027 = vadd.f32 %v403, %v1026
    %v1028 = vpop.f32.mrf.mxu0
    %v1029 = vadd.f32 %v403, %v1028
    %1030 = vdwg.mxu0
    %1031 = vmatpush.bf16.msra.mxu0 %v866
    %1032 = vmatpush.bf16.msra.mxu0 %v852
    %1033 = vmatpush.bf16.msra.mxu0 %v838
    %1034 = vmatpush.bf16.msra.mxu0 %v824
    %1035 = vmatpush.bf16.msra.mxu0 %v810
    %1036 = vmatpush.bf16.msra.mxu0 %v796
    %1037 = vmatpush.bf16.msra.mxu0 %v782
    %1038 = vmatpush.bf16.msra.mxu0 %v768
    %1039 = vmatmul.bf16.gmra.mxu0 %v284
    %v1040 = vpop.f32.mrf.mxu0
    %v1041 = vadd.f32 %v404, %v1040
    %v1042 = vpop.f32.mrf.mxu0
    %v1043 = vadd.f32 %v404, %v1042
    %1044 = vdwg.mxu0
    %1045 = vmatpush.bf16.msra.mxu0 %v867
    %1046 = vmatpush.bf16.msra.mxu0 %v853
    %1047 = vmatpush.bf16.msra.mxu0 %v839
    %1048 = vmatpush.bf16.msra.mxu0 %v825
    %1049 = vmatpush.bf16.msra.mxu0 %v811
    %1050 = vmatpush.bf16.msra.mxu0 %v797
    %1051 = vmatpush.bf16.msra.mxu0 %v783
    %1052 = vmatpush.bf16.msra.mxu0 %v769
    %1053 = vmatmul.bf16.gmra.mxu0 %v284
    %v1054 = vpop.f32.mrf.mxu0
    %v1055 = vadd.f32 %v405, %v1054
    %v1056 = vpop.f32.mrf.mxu0
    %v1057 = vadd.f32 %v405, %v1056
    %1058 = vdwg.mxu0
    %1059 = vmatpush.bf16.msra.mxu0 %v868
    %1060 = vmatpush.bf16.msra.mxu0 %v854
    %1061 = vmatpush.bf16.msra.mxu0 %v840
    %1062 = vmatpush.bf16.msra.mxu0 %v826
    %1063 = vmatpush.bf16.msra.mxu0 %v812
    %1064 = vmatpush.bf16.msra.mxu0 %v798
    %1065 = vmatpush.bf16.msra.mxu0 %v784
    %1066 = vmatpush.bf16.msra.mxu0 %v770
    %1067 = vmatmul.bf16.gmra.mxu0 %v284
    %v1068 = vpop.f32.mrf.mxu0
    %v1069 = vadd.f32 %v406, %v1068
    %v1070 = vpop.f32.mrf.mxu0
    %v1071 = vadd.f32 %v406, %v1070
    %1072 = vdwg.mxu0
    %1073 = vmatpush.bf16.msra.mxu0 %v869
    %1074 = vmatpush.bf16.msra.mxu0 %v855
    %1075 = vmatpush.bf16.msra.mxu0 %v841
    %1076 = vmatpush.bf16.msra.mxu0 %v827
    %1077 = vmatpush.bf16.msra.mxu0 %v813
    %1078 = vmatpush.bf16.msra.mxu0 %v799
    %1079 = vmatpush.bf16.msra.mxu0 %v785
    %1080 = vmatpush.bf16.msra.mxu0 %v771
    %1081 = vmatmul.bf16.gmra.mxu0 %v284
    %v1082 = vpop.f32.mrf.mxu0
    %v1083 = vadd.f32 %v407, %v1082
    %v1084 = vpop.f32.mrf.mxu0
    %v1085 = vadd.f32 %v407, %v1084
    %1086 = vdwg.mxu0
    %1087 = vmatpush.bf16.msra.mxu0 %v870
    %1088 = vmatpush.bf16.msra.mxu0 %v856
    %1089 = vmatpush.bf16.msra.mxu0 %v842
    %1090 = vmatpush.bf16.msra.mxu0 %v828
    %1091 = vmatpush.bf16.msra.mxu0 %v814
    %1092 = vmatpush.bf16.msra.mxu0 %v800
    %1093 = vmatpush.bf16.msra.mxu0 %v786
    %1094 = vmatpush.bf16.msra.mxu0 %v772
    %1095 = vmatmul.bf16.gmra.mxu0 %v284
    %v1096 = vpop.f32.mrf.mxu0
    %v1097 = vadd.f32 %v408, %v1096
    %v1098 = vpop.f32.mrf.mxu0
    %v1099 = vadd.f32 %v408, %v1098
    %1100 = vdwg.mxu0
    %1101 = vmatpush.bf16.msra.mxu0 %v871
    %1102 = vmatpush.bf16.msra.mxu0 %v857
    %1103 = vmatpush.bf16.msra.mxu0 %v843
    %1104 = vmatpush.bf16.msra.mxu0 %v829
    %1105 = vmatpush.bf16.msra.mxu0 %v815
    %1106 = vmatpush.bf16.msra.mxu0 %v801
    %1107 = vmatpush.bf16.msra.mxu0 %v787
    %1108 = vmatpush.bf16.msra.mxu0 %v773
    %1109 = vmatmul.bf16.gmra.mxu0 %v284
    %v1110 = vpop.f32.mrf.mxu0
    %v1111 = vadd.f32 %v409, %v1110
    %v1112 = vpop.f32.mrf.mxu0
    %v1113 = vadd.f32 %v409, %v1112
    %1114 = vdwg.mxu0
    %1115 = vmatpush.bf16.msra.mxu0 %v872
    %1116 = vmatpush.bf16.msra.mxu0 %v858
    %1117 = vmatpush.bf16.msra.mxu0 %v844
    %1118 = vmatpush.bf16.msra.mxu0 %v830
    %1119 = vmatpush.bf16.msra.mxu0 %v816
    %1120 = vmatpush.bf16.msra.mxu0 %v802
    %1121 = vmatpush.bf16.msra.mxu0 %v788
    %1122 = vmatpush.bf16.msra.mxu0 %v774
    %1123 = vmatmul.bf16.gmra.mxu0 %v284
    %v1124 = vpop.f32.mrf.mxu0
    %v1125 = vadd.f32 %v410, %v1124
    %v1126 = vpop.f32.mrf.mxu0
    %v1127 = vadd.f32 %v410, %v1126
    %1128 = vdwg.mxu0
    %1129 = vmatpush.bf16.msra.mxu0 %v873
    %1130 = vmatpush.bf16.msra.mxu0 %v859
    %1131 = vmatpush.bf16.msra.mxu0 %v845
    %1132 = vmatpush.bf16.msra.mxu0 %v831
    %1133 = vmatpush.bf16.msra.mxu0 %v817
    %1134 = vmatpush.bf16.msra.mxu0 %v803
    %1135 = vmatpush.bf16.msra.mxu0 %v789
    %1136 = vmatpush.bf16.msra.mxu0 %v775
    %1137 = vmatmul.bf16.gmra.mxu0 %v284
    %v1138 = vpop.f32.mrf.mxu0
    %v1139 = vadd.f32 %v411, %v1138
    %v1140 = vpop.f32.mrf.mxu0
    %v1141 = vadd.f32 %v411, %v1140
    %1142 = vdwg.mxu0
    %1143 = vmatpush.bf16.msra.mxu0 %v874
    %1144 = vmatpush.bf16.msra.mxu0 %v860
    %1145 = vmatpush.bf16.msra.mxu0 %v846
    %1146 = vmatpush.bf16.msra.mxu0 %v832
    %1147 = vmatpush.bf16.msra.mxu0 %v818
    %1148 = vmatpush.bf16.msra.mxu0 %v804
    %1149 = vmatpush.bf16.msra.mxu0 %v790
    %1150 = vmatpush.bf16.msra.mxu0 %v776
    %1151 = vmatmul.bf16.gmra.mxu0 %v284
    %v1152 = vpop.f32.mrf.mxu0
    %v1153 = vadd.f32 %v412, %v1152
    %v1154 = vpop.f32.mrf.mxu0
    %v1155 = vadd.f32 %v412, %v1154
    %1156 = vdwg.mxu0
    %1157 = vmatpush.bf16.msra.mxu0 %v875
    %1158 = vmatpush.bf16.msra.mxu0 %v861
    %1159 = vmatpush.bf16.msra.mxu0 %v847
    %1160 = vmatpush.bf16.msra.mxu0 %v833
    %1161 = vmatpush.bf16.msra.mxu0 %v819
    %1162 = vmatpush.bf16.msra.mxu0 %v805
    %1163 = vmatpush.bf16.msra.mxu0 %v791
    %1164 = vmatpush.bf16.msra.mxu0 %v777
    %1165 = vmatmul.bf16.gmra.mxu0 %v284
    %v1166 = vpop.f32.mrf.mxu0
    %v1167 = vadd.f32 %v413, %v1166
    %v1168 = vpop.f32.mrf.mxu0
    %v1169 = vadd.f32 %v413, %v1168
    %1170 = vdwg.mxu0
    %1171 = vmatpush.bf16.msra.mxu0 %v876
    %1172 = vmatpush.bf16.msra.mxu0 %v862
    %1173 = vmatpush.bf16.msra.mxu0 %v848
    %1174 = vmatpush.bf16.msra.mxu0 %v834
    %1175 = vmatpush.bf16.msra.mxu0 %v820
    %1176 = vmatpush.bf16.msra.mxu0 %v806
    %1177 = vmatpush.bf16.msra.mxu0 %v792
    %1178 = vmatpush.bf16.msra.mxu0 %v778
    %1179 = vmatmul.bf16.gmra.mxu0 %v284
    %v1180 = vpop.f32.mrf.mxu0
    %v1181 = vadd.f32 %v414, %v1180
    %v1182 = vpop.f32.mrf.mxu0
    %v1183 = vadd.f32 %v414, %v1182
    %1184 = vdwg.mxu0
    %v1185 = vmax.f32 %v999, 0.0
    %v1186 = vmax.f32 %v1013, 0.0
    %v1187 = vmax.f32 %v1027, 0.0
    %v1188 = vmax.f32 %v1041, 0.0
    %v1189 = vmax.f32 %v1055, 0.0
    %v1190 = vmax.f32 %v1069, 0.0
    %v1191 = vmax.f32 %v1083, 0.0
    %v1192 = vmax.f32 %v1097, 0.0
    %v1193 = vmax.f32 %v1111, 0.0
    %v1194 = vmax.f32 %v1125, 0.0
    %v1195 = vmax.f32 %v1139, 0.0
    %v1196 = vmax.f32 %v1153, 0.0
    %v1197 = vmax.f32 %v1167, 0.0
    %v1198 = vmax.f32 %v1181, 0.0
    %v1199 = vmax.f32 %v1001, 0.0
    %v1200 = vmax.f32 %v1015, 0.0
    %v1201 = vmax.f32 %v1029, 0.0
    %v1202 = vmax.f32 %v1043, 0.0
    %v1203 = vmax.f32 %v1057, 0.0
    %v1204 = vmax.f32 %v1071, 0.0
    %v1205 = vmax.f32 %v1085, 0.0
    %v1206 = vmax.f32 %v1099, 0.0
    %v1207 = vmax.f32 %v1113, 0.0
    %v1208 = vmax.f32 %v1127, 0.0
    %v1209 = vmax.f32 %v1141, 0.0
    %v1210 = vmax.f32 %v1155, 0.0
    %v1211 = vmax.f32 %v1169, 0.0
    %v1212 = vmax.f32 %v1183, 0.0
    %v1213 = vpack.c.bf16 %v1186, %v1185
    %v1214 = vpack.c.bf16 %v1188, %v1187
    %v1215 = vpack.c.bf16 %v1190, %v1189
    %v1216 = vpack.c.bf16 %v1192, %v1191
    %v1217 = vpack.c.bf16 %v1194, %v1193
    %v1218 = vpack.c.bf16 %v1196, %v1195
    %v1219 = vpack.c.bf16 %v1198, %v1197
    %v1220 = vpack.c.bf16 %v1200, %v1199
    %v1221 = vpack.c.bf16 %v1202, %v1201
    %v1222 = vpack.c.bf16 %v1204, %v1203
    %v1223 = vpack.c.bf16 %v1206, %v1205
    %v1224 = vpack.c.bf16 %v1208, %v1207
    %v1225 = vpack.c.bf16 %v1210, %v1209
    %v1226 = vpack.c.bf16 %v1212, %v1211
    %1227 = vst [vmem:[#allocation2] sm:$0xf] %v1213
    %1228 = vst [vmem:[#allocation2 + $0x4] sm:$0xf] %v1220
    %v1231 = vrot.slane %v1213, 4
    %v1232 = vrot.slane %v1220, 4
    %1235 = vst [vmem:[#allocation2 + $0x8] sm:$0xf] %v1231
    %1236 = vst [vmem:[#allocation2 + $0xc] sm:$0xf] %v1232
    %1237 = vst [vmem:[#allocation2 + $0x10] sm:$0xf] %v1214
    %1238 = vst [vmem:[#allocation2 + $0x14] sm:$0xf] %v1221
    %v1241 = vrot.slane %v1214, 4
    %v1242 = vrot.slane %v1221, 4
    %1245 = vst [vmem:[#allocation2 + $0x18] sm:$0xf] %v1241
    %1246 = vst [vmem:[#allocation2 + $0x1c] sm:$0xf] %v1242
    %1247 = vst [vmem:[#allocation2 + $0x20] sm:$0xf] %v1215
    %1248 = vst [vmem:[#allocation2 + $0x24] sm:$0xf] %v1222
    %v1251 = vrot.slane %v1215, 4
    %v1252 = vrot.slane %v1222, 4
    %1255 = vst [vmem:[#allocation2 + $0x28] sm:$0xf] %v1251
    %1256 = vst [vmem:[#allocation2 + $0x2c] sm:$0xf] %v1252
    %1257 = vst [vmem:[#allocation2 + $0x30] sm:$0xf] %v1216
    %1258 = vst [vmem:[#allocation2 + $0x34] sm:$0xf] %v1223
    %v1261 = vrot.slane %v1216, 4
    %v1262 = vrot.slane %v1223, 4
    %1265 = vst [vmem:[#allocation2 + $0x38] sm:$0xf] %v1261
    %1266 = vst [vmem:[#allocation2 + $0x3c] sm:$0xf] %v1262
    %1267 = vst [vmem:[#allocation2 + $0x40] sm:$0xf] %v1217
    %1268 = vst [vmem:[#allocation2 + $0x44] sm:$0xf] %v1224
    %v1271 = vrot.slane %v1217, 4
    %v1272 = vrot.slane %v1224, 4
    %1275 = vst [vmem:[#allocation2 + $0x48] sm:$0xf] %v1271
    %1276 = vst [vmem:[#allocation2 + $0x4c] sm:$0xf] %v1272
    %1277 = vst [vmem:[#allocation2 + $0x50] sm:$0xf] %v1218
    %1278 = vst [vmem:[#allocation2 + $0x54] sm:$0xf] %v1225
    %v1281 = vrot.slane %v1218, 4
    %v1282 = vrot.slane %v1225, 4
    %1285 = vst [vmem:[#allocation2 + $0x58] sm:$0xf] %v1281
    %1286 = vst [vmem:[#allocation2 + $0x5c] sm:$0xf] %v1282
    %1287 = vst [vmem:[#allocation2 + $0x60] sm:$0xf] %v1219
    %1288 = vst [vmem:[#allocation2 + $0x64] sm:$0xf] %v1226
    %v1291 = vrot.slane %v1219, 4
    %v1292 = vrot.slane %v1226, 4
    %1295 = vst [vmem:[#allocation2 + $0x68] sm:$0xf] %v1291
    %1296 = vst [vmem:[#allocation2 + $0x6c] sm:$0xf] %v1292
    %v1297 = vld [vmem:[#allocation2] sm:$0xf]
    %v1298 = vld [vmem:[#allocation2 + $0x4] sm:$0xf]
    %v1299 = vld [vmem:[#allocation2 + $0x8] sm:$0xf]
    %v1300 = vld [vmem:[#allocation2 + $0xc] sm:$0xf]
    %v1301 = vld [vmem:[#allocation2 + $0x10] sm:$0xf]
    %v1302 = vld [vmem:[#allocation2 + $0x14] sm:$0xf]
    %v1303 = vld [vmem:[#allocation2 + $0x18] sm:$0xf]
    %v1304 = vld [vmem:[#allocation2 + $0x1c] sm:$0xf]
    %v1305 = vld [vmem:[#allocation2 + $0x20] sm:$0xf]
    %v1306 = vld [vmem:[#allocation2 + $0x24] sm:$0xf]
    %v1307 = vld [vmem:[#allocation2 + $0x28] sm:$0xf]
    %v1308 = vld [vmem:[#allocation2 + $0x2c] sm:$0xf]
    %v1309 = vld [vmem:[#allocation2 + $0x30] sm:$0xf]
    %v1310 = vld [vmem:[#allocation2 + $0x34] sm:$0xf]
    %v1311 = vld [vmem:[#allocation2 + $0x38] sm:$0xf]
    %v1312 = vld [vmem:[#allocation2 + $0x3c] sm:$0xf]
    %v1313 = vld [vmem:[#allocation2 + $0x40] sm:$0xf]
    %v1314 = vld [vmem:[#allocation2 + $0x44] sm:$0xf]
    %v1315 = vld [vmem:[#allocation2 + $0x48] sm:$0xf]
    %v1316 = vld [vmem:[#allocation2 + $0x4c] sm:$0xf]
    %v1317 = vld [vmem:[#allocation2 + $0x50] sm:$0xf]
    %v1318 = vld [vmem:[#allocation2 + $0x54] sm:$0xf]
    %v1319 = vld [vmem:[#allocation2 + $0x58] sm:$0xf]
    %v1320 = vld [vmem:[#allocation2 + $0x5c] sm:$0xf]
    %v1321 = vld [vmem:[#allocation8] sm:$0xf]
    %v1322 = vld [vmem:[#allocation8 + $0x4] sm:$0xf]
    %v1323 = vld [vmem:[#allocation8 + $0x8] sm:$0xf]
    %v1324 = vld [vmem:[#allocation8 + $0xc] sm:$0xf]
    %v1325 = vld [vmem:[#allocation8 + $0x10] sm:$0xf]
    %v1326 = vld [vmem:[#allocation8 + $0x14] sm:$0xf]
    %v1327 = vld [vmem:[#allocation8 + $0x18] sm:$0xf]
    %v1328 = vld [vmem:[#allocation8 + $0x1c] sm:$0xf]
    %v1329 = vld [vmem:[#allocation8 + $0x20] sm:$0xf]
    %v1330 = vld [vmem:[#allocation8 + $0x24] sm:$0xf]
    %v1331 = vld [vmem:[#allocation8 + $0x28] sm:$0xf]
    %v1332 = vld [vmem:[#allocation8 + $0x2c] sm:$0xf]
    %v1333 = vld [vmem:[#allocation8 + $0x30] sm:$0xf]
    %v1334 = vld [vmem:[#allocation8 + $0x34] sm:$0xf]
    %v1335 = vld [vmem:[#allocation8 + $0x38] sm:$0xf]
    %v1336 = vld [vmem:[#allocation8 + $0x3c] sm:$0xf]
    %v1337 = vld [vmem:[#allocation2 + $0x60] sm:$0xf]
    %v1338 = vld [vmem:[#allocation2 + $0x64] sm:$0xf]
    %s1339 = scalar_lea.vmem [#allocation8], 64
    %v1340 = vld [vmem:[%s1339] sm:$0xf]
    %v1341 = vld [vmem:[%s1339 + $0x4] sm:$0xf]
    %v1342 = vld [vmem:[%s1339 + $0x8] sm:$0xf]
    %v1343 = vld [vmem:[%s1339 + $0xc] sm:$0xf]
    %v1344 = vld [vmem:[%s1339 + $0x10] sm:$0xf]
    %v1345 = vld [vmem:[%s1339 + $0x14] sm:$0xf]
    %v1346 = vld [vmem:[%s1339 + $0x18] sm:$0xf]
    %v1347 = vld [vmem:[%s1339 + $0x1c] sm:$0xf]
    %v1348 = vld [vmem:[%s1339 + $0x20] sm:$0xf]
    %v1349 = vld [vmem:[%s1339 + $0x24] sm:$0xf]
    %v1350 = vld [vmem:[%s1339 + $0x28] sm:$0xf]
    %v1351 = vld [vmem:[%s1339 + $0x2c] sm:$0xf]
    %v1352 = vld [vmem:[%s1339 + $0x30] sm:$0xf]
    %v1353 = vld [vmem:[%s1339 + $0x34] sm:$0xf]
    %v1354 = vld [vmem:[%s1339 + $0x38] sm:$0xf]
    %v1355 = vld [vmem:[%s1339 + $0x3c] sm:$0xf]
    %v1380 = vunpack.c.l.b16 %v1299
    %v1381 = vunpack.c.l.b16 %v1300
    %v1382 = vunpack.c.l.b16 %v1301
    %v1383 = vunpack.c.l.b16 %v1302
    %v1384 = vunpack.c.l.b16 %v1303
    %v1385 = vunpack.c.l.b16 %v1304
    %v1386 = vunpack.c.l.b16 %v1305
    %v1387 = vunpack.c.l.b16 %v1306
    %v1388 = vunpack.c.l.b16 %v1307
    %v1389 = vunpack.c.l.b16 %v1308
    %v1390 = vunpack.c.l.b16 %v1309
    %v1391 = vunpack.c.l.b16 %v1310
    %v1392 = vunpack.c.l.b16 %v1311
    %v1393 = vunpack.c.l.b16 %v1312
    %v1394 = vunpack.c.l.b16 %v1313
    %v1395 = vunpack.c.l.b16 %v1314
    %v1396 = vunpack.c.l.b16 %v1315
    %v1397 = vunpack.c.l.b16 %v1316
    %v1398 = vunpack.c.l.b16 %v1317
    %v1399 = vunpack.c.l.b16 %v1318
    %v1400 = vunpack.c.l.b16 %v1319
    %v1401 = vunpack.c.l.b16 %v1320
    %v1402 = vunpack.c.l.b16 %v1337
    %v1403 = vunpack.c.l.b16 %v1338
    %v1404 = vpack.c.b16 %v1381, %v1380
    %v1405 = vpack.c.b16 %v1383, %v1382
    %v1406 = vpack.c.b16 %v1385, %v1384
    %v1407 = vpack.c.b16 %v1387, %v1386
    %v1408 = vpack.c.b16 %v1389, %v1388
    %v1409 = vpack.c.b16 %v1391, %v1390
    %v1410 = vpack.c.b16 %v1393, %v1392
    %v1411 = vpack.c.b16 %v1395, %v1394
    %v1412 = vpack.c.b16 %v1397, %v1396
    %v1413 = vpack.c.b16 %v1399, %v1398
    %v1414 = vpack.c.b16 %v1401, %v1400
    %v1415 = vpack.c.b16 %v1403, %v1402
    %v1444 = vunpack.c.l.b16 %v1340
    %v1445 = vunpack.c.l.b16 %v1341
    %v1446 = vunpack.c.l.b16 %v1342
    %v1447 = vunpack.c.l.b16 %v1343
    %v1448 = vunpack.c.l.b16 %v1344
    %v1449 = vunpack.c.l.b16 %v1345
    %v1450 = vunpack.c.l.b16 %v1346
    %v1451 = vunpack.c.l.b16 %v1347
    %v1452 = vunpack.c.l.b16 %v1348
    %v1453 = vunpack.c.l.b16 %v1349
    %v1454 = vunpack.c.l.b16 %v1350
    %v1455 = vunpack.c.l.b16 %v1351
    %v1456 = vunpack.c.l.b16 %v1352
    %v1457 = vunpack.c.l.b16 %v1353
    %v1458 = vunpack.c.l.b16 %v1354
    %v1459 = vunpack.c.l.b16 %v1355
    %v1460 = vpack.c.b16 %v1445, %v1444
    %v1461 = vpack.c.b16 %v1447, %v1446
    %v1462 = vpack.c.b16 %v1449, %v1448
    %v1463 = vpack.c.b16 %v1451, %v1450
    %v1464 = vpack.c.b16 %v1453, %v1452
    %v1465 = vpack.c.b16 %v1455, %v1454
    %v1466 = vpack.c.b16 %v1457, %v1456
    %v1467 = vpack.c.b16 %v1459, %v1458
    %1476 = vmatpush.bf16.msra.mxu0 %v1467
    %1477 = vmatpush.bf16.msra.mxu0 %v1466
    %1478 = vmatpush.bf16.msra.mxu0 %v1465
    %1479 = vmatpush.bf16.msra.mxu0 %v1464
    %1480 = vmatpush.bf16.msra.mxu0 %v1463
    %1481 = vmatpush.bf16.msra.mxu0 %v1462
    %1482 = vmatpush.bf16.msra.mxu0 %v1461
    %1483 = vmatpush.bf16.msra.mxu0 %v1460
    %1484 = vmatmul.bf16.gmra.mxu0 %v1404
    %v1485 = vpop.f32.mrf.mxu0
    %v1486 = vadd.f32 0.0, %v1485
    %v1487 = vpop.f32.mrf.mxu0
    %v1488 = vadd.f32 0.0, %v1487
    %1489 = vmatmul.bf16.gmra.mxu0 %v1405
    %v1490 = vpop.f32.mrf.mxu0
    %v1491 = vadd.f32 0.0, %v1490
    %v1492 = vpop.f32.mrf.mxu0
    %v1493 = vadd.f32 0.0, %v1492
    %1494 = vmatmul.bf16.gmra.mxu0 %v1406
    %v1495 = vpop.f32.mrf.mxu0
    %v1496 = vadd.f32 0.0, %v1495
    %v1497 = vpop.f32.mrf.mxu0
    %v1498 = vadd.f32 0.0, %v1497
    %1499 = vmatmul.bf16.gmra.mxu0 %v1407
    %v1500 = vpop.f32.mrf.mxu0
    %v1501 = vadd.f32 0.0, %v1500
    %v1502 = vpop.f32.mrf.mxu0
    %v1503 = vadd.f32 0.0, %v1502
    %1504 = vmatmul.bf16.gmra.mxu0 %v1408
    %v1505 = vpop.f32.mrf.mxu0
    %v1506 = vadd.f32 0.0, %v1505
    %v1507 = vpop.f32.mrf.mxu0
    %v1508 = vadd.f32 0.0, %v1507
    %1509 = vmatmul.bf16.gmra.mxu0 %v1409
    %v1510 = vpop.f32.mrf.mxu0
    %v1511 = vadd.f32 0.0, %v1510
    %v1512 = vpop.f32.mrf.mxu0
    %v1513 = vadd.f32 0.0, %v1512
    %1514 = vmatmul.bf16.gmra.mxu0 %v1410
    %v1515 = vpop.f32.mrf.mxu0
    %v1516 = vadd.f32 0.0, %v1515
    %v1517 = vpop.f32.mrf.mxu0
    %v1518 = vadd.f32 0.0, %v1517
    %1519 = vmatmul.bf16.gmra.mxu0 %v1411
    %v1520 = vpop.f32.mrf.mxu0
    %v1521 = vadd.f32 0.0, %v1520
    %v1522 = vpop.f32.mrf.mxu0
    %v1523 = vadd.f32 0.0, %v1522
    %1524 = vmatmul.bf16.gmra.mxu0 %v1412
    %v1525 = vpop.f32.mrf.mxu0
    %v1526 = vadd.f32 0.0, %v1525
    %v1527 = vpop.f32.mrf.mxu0
    %v1528 = vadd.f32 0.0, %v1527
    %1529 = vmatmul.bf16.gmra.mxu0 %v1413
    %v1530 = vpop.f32.mrf.mxu0
    %v1531 = vadd.f32 0.0, %v1530
    %v1532 = vpop.f32.mrf.mxu0
    %v1533 = vadd.f32 0.0, %v1532
    %1534 = vmatmul.bf16.gmra.mxu0 %v1414
    %v1535 = vpop.f32.mrf.mxu0
    %v1536 = vadd.f32 0.0, %v1535
    %v1537 = vpop.f32.mrf.mxu0
    %v1538 = vadd.f32 0.0, %v1537
    %1539 = vmatmul.bf16.gmra.mxu0 %v1415
    %v1540 = vpop.f32.mrf.mxu0
    %v1541 = vadd.f32 0.0, %v1540
    %v1542 = vpop.f32.mrf.mxu0
    %v1543 = vadd.f32 0.0, %v1542
    %1544 = vdwg.mxu0
    %v1547 = vunpack.c.l.b16 %v1297
    %v1548 = vunpack.c.l.b16 %v1298
    %v1549 = vpack.c.b16 %v1548, %v1547
    %v1567 = vunpack.c.l.b16 %v1321
    %v1568 = vunpack.c.l.b16 %v1322
    %v1569 = vunpack.c.l.b16 %v1323
    %v1570 = vunpack.c.l.b16 %v1324
    %v1571 = vunpack.c.l.b16 %v1325
    %v1572 = vunpack.c.l.b16 %v1326
    %v1573 = vunpack.c.l.b16 %v1327
    %v1574 = vunpack.c.l.b16 %v1328
    %v1575 = vunpack.c.l.b16 %v1329
    %v1576 = vunpack.c.l.b16 %v1330
    %v1577 = vunpack.c.l.b16 %v1331
    %v1578 = vunpack.c.l.b16 %v1332
    %v1579 = vunpack.c.l.b16 %v1333
    %v1580 = vunpack.c.l.b16 %v1334
    %v1581 = vunpack.c.l.b16 %v1335
    %v1582 = vunpack.c.l.b16 %v1336
    %v1583 = vpack.c.b16 %v1568, %v1567
    %v1584 = vpack.c.b16 %v1570, %v1569
    %v1585 = vpack.c.b16 %v1572, %v1571
    %v1586 = vpack.c.b16 %v1574, %v1573
    %v1587 = vpack.c.b16 %v1576, %v1575
    %v1588 = vpack.c.b16 %v1578, %v1577
    %v1589 = vpack.c.b16 %v1580, %v1579
    %v1590 = vpack.c.b16 %v1582, %v1581
    %1599 = vmatpush.bf16.msra.mxu0 %v1590
    %1600 = vmatpush.bf16.msra.mxu0 %v1589
    %1601 = vmatpush.bf16.msra.mxu0 %v1588
    %1602 = vmatpush.bf16.msra.mxu0 %v1587
    %1603 = vmatpush.bf16.msra.mxu0 %v1586
    %1604 = vmatpush.bf16.msra.mxu0 %v1585
    %1605 = vmatpush.bf16.msra.mxu0 %v1584
    %1606 = vmatpush.bf16.msra.mxu0 %v1583
    %1607 = vmatmul.bf16.gmra.mxu0 %v1549
    %v1608 = vpop.f32.mrf.mxu0
    %v1609 = vadd.f32 %v1486, %v1608
    %v1610 = vpop.f32.mrf.mxu0
    %v1611 = vadd.f32 %v1488, %v1610
    %1612 = vmatmul.bf16.gmra.mxu0 %v1404
    %v1613 = vpop.f32.mrf.mxu0
    %v1614 = vadd.f32 %v1491, %v1613
    %v1615 = vpop.f32.mrf.mxu0
    %v1616 = vadd.f32 %v1493, %v1615
    %1617 = vmatmul.bf16.gmra.mxu0 %v1405
    %v1618 = vpop.f32.mrf.mxu0
    %v1619 = vadd.f32 %v1496, %v1618
    %v1620 = vpop.f32.mrf.mxu0
    %v1621 = vadd.f32 %v1498, %v1620
    %1622 = vmatmul.bf16.gmra.mxu0 %v1406
    %v1623 = vpop.f32.mrf.mxu0
    %v1624 = vadd.f32 %v1501, %v1623
    %v1625 = vpop.f32.mrf.mxu0
    %v1626 = vadd.f32 %v1503, %v1625
    %1627 = vmatmul.bf16.gmra.mxu0 %v1407
    %v1628 = vpop.f32.mrf.mxu0
    %v1629 = vadd.f32 %v1506, %v1628
    %v1630 = vpop.f32.mrf.mxu0
    %v1631 = vadd.f32 %v1508, %v1630
    %1632 = vmatmul.bf16.gmra.mxu0 %v1408
    %v1633 = vpop.f32.mrf.mxu0
    %v1634 = vadd.f32 %v1511, %v1633
    %v1635 = vpop.f32.mrf.mxu0
    %v1636 = vadd.f32 %v1513, %v1635
    %1637 = vmatmul.bf16.gmra.mxu0 %v1409
    %v1638 = vpop.f32.mrf.mxu0
    %v1639 = vadd.f32 %v1516, %v1638
    %v1640 = vpop.f32.mrf.mxu0
    %v1641 = vadd.f32 %v1518, %v1640
    %1642 = vmatmul.bf16.gmra.mxu0 %v1410
    %v1643 = vpop.f32.mrf.mxu0
    %v1644 = vadd.f32 %v1521, %v1643
    %v1645 = vpop.f32.mrf.mxu0
    %v1646 = vadd.f32 %v1523, %v1645
    %1647 = vmatmul.bf16.gmra.mxu0 %v1411
    %v1648 = vpop.f32.mrf.mxu0
    %v1649 = vadd.f32 %v1526, %v1648
    %v1650 = vpop.f32.mrf.mxu0
    %v1651 = vadd.f32 %v1528, %v1650
    %1652 = vmatmul.bf16.gmra.mxu0 %v1412
    %v1653 = vpop.f32.mrf.mxu0
    %v1654 = vadd.f32 %v1531, %v1653
    %v1655 = vpop.f32.mrf.mxu0
    %v1656 = vadd.f32 %v1533, %v1655
    %1657 = vmatmul.bf16.gmra.mxu0 %v1413
    %v1658 = vpop.f32.mrf.mxu0
    %v1659 = vadd.f32 %v1536, %v1658
    %v1660 = vpop.f32.mrf.mxu0
    %v1661 = vadd.f32 %v1538, %v1660
    %1662 = vmatmul.bf16.gmra.mxu0 %v1414
    %v1663 = vpop.f32.mrf.mxu0
    %v1664 = vadd.f32 %v1541, %v1663
    %v1665 = vpop.f32.mrf.mxu0
    %v1666 = vadd.f32 %v1543, %v1665
    %1667 = vdwg.mxu0
    %v1668 = vld [vmem:[#allocation2 + $0x10] sm:$0xf]
    %v1669 = vld [vmem:[#allocation2 + $0x14] sm:$0xf]
    %v1670 = vld [vmem:[#allocation2 + $0x18] sm:$0xf]
    %v1671 = vld [vmem:[#allocation2 + $0x1c] sm:$0xf]
    %v1672 = vld [vmem:[#allocation2 + $0x20] sm:$0xf]
    %v1673 = vld [vmem:[#allocation2 + $0x24] sm:$0xf]
    %v1674 = vld [vmem:[#allocation2 + $0x28] sm:$0xf]
    %v1675 = vld [vmem:[#allocation2 + $0x2c] sm:$0xf]
    %v1676 = vld [vmem:[#allocation2 + $0x30] sm:$0xf]
    %v1677 = vld [vmem:[#allocation2 + $0x34] sm:$0xf]
    %v1678 = vld [vmem:[#allocation2 + $0x38] sm:$0xf]
    %v1679 = vld [vmem:[#allocation2 + $0x3c] sm:$0xf]
    %v1680 = vld [vmem:[#allocation2 + $0x40] sm:$0xf]
    %v1681 = vld [vmem:[#allocation2 + $0x44] sm:$0xf]
    %v1682 = vld [vmem:[#allocation2 + $0x48] sm:$0xf]
    %v1683 = vld [vmem:[#allocation2 + $0x4c] sm:$0xf]
    %v1684 = vld [vmem:[#allocation2 + $0x50] sm:$0xf]
    %v1685 = vld [vmem:[#allocation2 + $0x54] sm:$0xf]
    %v1686 = vld [vmem:[#allocation2 + $0x58] sm:$0xf]
    %v1687 = vld [vmem:[#allocation2 + $0x5c] sm:$0xf]
    %v1688 = vld [vmem:[#allocation2 + $0x60] sm:$0xf]
    %v1689 = vld [vmem:[#allocation2 + $0x64] sm:$0xf]
    %v1690 = vld [vmem:[#allocation2 + $0x68] sm:$0xf]
    %v1691 = vld [vmem:[#allocation2 + $0x6c] sm:$0xf]
    %s1692 = scalar_lea.vmem [#allocation8], 128
    %v1693 = vld [vmem:[%s1692] sm:$0xf]
    %v1694 = vld [vmem:[%s1692 + $0x4] sm:$0xf]
    %v1695 = vld [vmem:[%s1692 + $0x8] sm:$0xf]
    %v1696 = vld [vmem:[%s1692 + $0xc] sm:$0xf]
    %v1697 = vld [vmem:[%s1692 + $0x10] sm:$0xf]
    %v1698 = vld [vmem:[%s1692 + $0x14] sm:$0xf]
    %v1699 = vld [vmem:[%s1692 + $0x18] sm:$0xf]
    %v1700 = vld [vmem:[%s1692 + $0x1c] sm:$0xf]
    %v1701 = vld [vmem:[%s1692 + $0x20] sm:$0xf]
    %v1702 = vld [vmem:[%s1692 + $0x24] sm:$0xf]
    %v1703 = vld [vmem:[%s1692 + $0x28] sm:$0xf]
    %v1704 = vld [vmem:[%s1692 + $0x2c] sm:$0xf]
    %v1705 = vld [vmem:[%s1692 + $0x30] sm:$0xf]
    %v1706 = vld [vmem:[%s1692 + $0x34] sm:$0xf]
    %v1707 = vld [vmem:[%s1692 + $0x38] sm:$0xf]
    %v1708 = vld [vmem:[%s1692 + $0x3c] sm:$0xf]
    %v1733 = vunpack.c.l.b16 %v1668
    %v1734 = vunpack.c.l.b16 %v1669
    %v1735 = vunpack.c.l.b16 %v1670
    %v1736 = vunpack.c.l.b16 %v1671
    %v1737 = vunpack.c.l.b16 %v1672
    %v1738 = vunpack.c.l.b16 %v1673
    %v1739 = vunpack.c.l.b16 %v1674
    %v1740 = vunpack.c.l.b16 %v1675
    %v1741 = vunpack.c.l.b16 %v1676
    %v1742 = vunpack.c.l.b16 %v1677
    %v1743 = vunpack.c.l.b16 %v1678
    %v1744 = vunpack.c.l.b16 %v1679
    %v1745 = vunpack.c.l.b16 %v1680
    %v1746 = vunpack.c.l.b16 %v1681
    %v1747 = vunpack.c.l.b16 %v1682
    %v1748 = vunpack.c.l.b16 %v1683
    %v1749 = vunpack.c.l.b16 %v1684
    %v1750 = vunpack.c.l.b16 %v1685
    %v1751 = vunpack.c.l.b16 %v1686
    %v1752 = vunpack.c.l.b16 %v1687
    %v1753 = vunpack.c.l.b16 %v1688
    %v1754 = vunpack.c.l.b16 %v1689
    %v1755 = vunpack.c.l.b16 %v1690
    %v1756 = vunpack.c.l.b16 %v1691
    %v1757 = vpack.c.b16 %v1734, %v1733
    %v1758 = vpack.c.b16 %v1736, %v1735
    %v1759 = vpack.c.b16 %v1738, %v1737
    %v1760 = vpack.c.b16 %v1740, %v1739
    %v1761 = vpack.c.b16 %v1742, %v1741
    %v1762 = vpack.c.b16 %v1744, %v1743
    %v1763 = vpack.c.b16 %v1746, %v1745
    %v1764 = vpack.c.b16 %v1748, %v1747
    %v1765 = vpack.c.b16 %v1750, %v1749
    %v1766 = vpack.c.b16 %v1752, %v1751
    %v1767 = vpack.c.b16 %v1754, %v1753
    %v1768 = vpack.c.b16 %v1756, %v1755
    %v1797 = vunpack.c.l.b16 %v1693
    %v1798 = vunpack.c.l.b16 %v1694
    %v1799 = vunpack.c.l.b16 %v1695
    %v1800 = vunpack.c.l.b16 %v1696
    %v1801 = vunpack.c.l.b16 %v1697
    %v1802 = vunpack.c.l.b16 %v1698
    %v1803 = vunpack.c.l.b16 %v1699
    %v1804 = vunpack.c.l.b16 %v1700
    %v1805 = vunpack.c.l.b16 %v1701
    %v1806 = vunpack.c.l.b16 %v1702
    %v1807 = vunpack.c.l.b16 %v1703
    %v1808 = vunpack.c.l.b16 %v1704
    %v1809 = vunpack.c.l.b16 %v1705
    %v1810 = vunpack.c.l.b16 %v1706
    %v1811 = vunpack.c.l.b16 %v1707
    %v1812 = vunpack.c.l.b16 %v1708
    %v1813 = vpack.c.b16 %v1798, %v1797
    %v1814 = vpack.c.b16 %v1800, %v1799
    %v1815 = vpack.c.b16 %v1802, %v1801
    %v1816 = vpack.c.b16 %v1804, %v1803
    %v1817 = vpack.c.b16 %v1806, %v1805
    %v1818 = vpack.c.b16 %v1808, %v1807
    %v1819 = vpack.c.b16 %v1810, %v1809
    %v1820 = vpack.c.b16 %v1812, %v1811
    %1829 = vmatpush.bf16.msra.mxu0 %v1820
    %1830 = vmatpush.bf16.msra.mxu0 %v1819
    %1831 = vmatpush.bf16.msra.mxu0 %v1818
    %1832 = vmatpush.bf16.msra.mxu0 %v1817
    %1833 = vmatpush.bf16.msra.mxu0 %v1816
    %1834 = vmatpush.bf16.msra.mxu0 %v1815
    %1835 = vmatpush.bf16.msra.mxu0 %v1814
    %1836 = vmatpush.bf16.msra.mxu0 %v1813
    %1837 = vmatmul.bf16.gmra.mxu0 %v1757
    %v1838 = vpop.f32.mrf.mxu0
    %v1839 = vadd.f32 0.0, %v1838
    %v1840 = vpop.f32.mrf.mxu0
    %v1841 = vadd.f32 0.0, %v1840
    %1842 = vmatmul.bf16.gmra.mxu0 %v1758
    %v1843 = vpop.f32.mrf.mxu0
    %v1844 = vadd.f32 0.0, %v1843
    %v1845 = vpop.f32.mrf.mxu0
    %v1846 = vadd.f32 0.0, %v1845
    %1847 = vmatmul.bf16.gmra.mxu0 %v1759
    %v1848 = vpop.f32.mrf.mxu0
    %v1849 = vadd.f32 0.0, %v1848
    %v1850 = vpop.f32.mrf.mxu0
    %v1851 = vadd.f32 0.0, %v1850
    %1852 = vmatmul.bf16.gmra.mxu0 %v1760
    %v1853 = vpop.f32.mrf.mxu0
    %v1854 = vadd.f32 0.0, %v1853
    %v1855 = vpop.f32.mrf.mxu0
    %v1856 = vadd.f32 0.0, %v1855
    %1857 = vmatmul.bf16.gmra.mxu0 %v1761
    %v1858 = vpop.f32.mrf.mxu0
    %v1859 = vadd.f32 0.0, %v1858
    %v1860 = vpop.f32.mrf.mxu0
    %v1861 = vadd.f32 0.0, %v1860
    %1862 = vmatmul.bf16.gmra.mxu0 %v1762
    %v1863 = vpop.f32.mrf.mxu0
    %v1864 = vadd.f32 0.0, %v1863
    %v1865 = vpop.f32.mrf.mxu0
    %v1866 = vadd.f32 0.0, %v1865
    %1867 = vmatmul.bf16.gmra.mxu0 %v1763
    %v1868 = vpop.f32.mrf.mxu0
    %v1869 = vadd.f32 0.0, %v1868
    %v1870 = vpop.f32.mrf.mxu0
    %v1871 = vadd.f32 0.0, %v1870
    %1872 = vmatmul.bf16.gmra.mxu0 %v1764
    %v1873 = vpop.f32.mrf.mxu0
    %v1874 = vadd.f32 0.0, %v1873
    %v1875 = vpop.f32.mrf.mxu0
    %v1876 = vadd.f32 0.0, %v1875
    %1877 = vmatmul.bf16.gmra.mxu0 %v1765
    %v1878 = vpop.f32.mrf.mxu0
    %v1879 = vadd.f32 0.0, %v1878
    %v1880 = vpop.f32.mrf.mxu0
    %v1881 = vadd.f32 0.0, %v1880
    %1882 = vmatmul.bf16.gmra.mxu0 %v1766
    %v1883 = vpop.f32.mrf.mxu0
    %v1884 = vadd.f32 0.0, %v1883
    %v1885 = vpop.f32.mrf.mxu0
    %v1886 = vadd.f32 0.0, %v1885
    %1887 = vmatmul.bf16.gmra.mxu0 %v1767
    %v1888 = vpop.f32.mrf.mxu0
    %v1889 = vadd.f32 0.0, %v1888
    %v1890 = vpop.f32.mrf.mxu0
    %v1891 = vadd.f32 0.0, %v1890
    %1892 = vmatmul.bf16.gmra.mxu0 %v1768
    %v1893 = vpop.f32.mrf.mxu0
    %v1894 = vadd.f32 0.0, %v1893
    %v1895 = vpop.f32.mrf.mxu0
    %v1896 = vadd.f32 0.0, %v1895
    %1897 = vdwg.mxu0
    %v1898 = vadd.f32 %v1609, %v1839
    %v1899 = vadd.f32 %v1611, %v1841
    %v1900 = vadd.f32 %v1614, %v1844
    %v1901 = vadd.f32 %v1616, %v1846
    %v1902 = vadd.f32 %v1619, %v1849
    %v1903 = vadd.f32 %v1621, %v1851
    %v1904 = vadd.f32 %v1624, %v1854
    %v1905 = vadd.f32 %v1626, %v1856
    %v1906 = vadd.f32 %v1629, %v1859
    %v1907 = vadd.f32 %v1631, %v1861
    %v1908 = vadd.f32 %v1634, %v1864
    %v1909 = vadd.f32 %v1636, %v1866
    %v1910 = vadd.f32 %v1639, %v1869
    %v1911 = vadd.f32 %v1641, %v1871
    %v1912 = vadd.f32 %v1644, %v1874
    %v1913 = vadd.f32 %v1646, %v1876
    %v1914 = vadd.f32 %v1649, %v1879
    %v1915 = vadd.f32 %v1651, %v1881
    %v1916 = vadd.f32 %v1654, %v1884
    %v1917 = vadd.f32 %v1656, %v1886
    %v1918 = vadd.f32 %v1659, %v1889
    %v1919 = vadd.f32 %v1661, %v1891
    %v1920 = vadd.f32 %v1664, %v1894
    %v1921 = vadd.f32 %v1666, %v1896
    %v1922 = vld [vmem:[%s6] sm:$0x1]
    %v1924 = vperm.slane %v1922, 0
    %v1926 = vadd.f32 %v1898, %v1924
    %v1927 = vadd.f32 %v1899, %v1924
    %v1928 = vadd.f32 %v1900, %v1924
    %v1929 = vadd.f32 %v1901, %v1924
    %v1930 = vadd.f32 %v1902, %v1924
    %v1931 = vadd.f32 %v1903, %v1924
    %v1932 = vadd.f32 %v1904, %v1924
    %v1933 = vadd.f32 %v1905, %v1924
    %v1934 = vadd.f32 %v1906, %v1924
    %v1935 = vadd.f32 %v1907, %v1924
    %v1936 = vadd.f32 %v1908, %v1924
    %v1937 = vadd.f32 %v1909, %v1924
    %v1938 = vadd.f32 %v1910, %v1924
    %v1939 = vadd.f32 %v1911, %v1924
    %v1940 = vadd.f32 %v1912, %v1924
    %v1941 = vadd.f32 %v1913, %v1924
    %v1942 = vadd.f32 %v1914, %v1924
    %v1943 = vadd.f32 %v1915, %v1924
    %v1944 = vadd.f32 %v1916, %v1924
    %v1945 = vadd.f32 %v1917, %v1924
    %v1946 = vadd.f32 %v1918, %v1924
    %v1947 = vadd.f32 %v1919, %v1924
    %v1948 = vadd.f32 %v1920, %v1924
    %v1949 = vadd.f32 %v1921, %v1924
    %v1950 = vmax.f32 %v1926, 0.0
    %v1951 = vmax.f32 %v1927, 0.0
    %v1952 = vmax.f32 %v1928, 0.0
    %v1953 = vmax.f32 %v1929, 0.0
    %v1954 = vmax.f32 %v1930, 0.0
    %v1955 = vmax.f32 %v1931, 0.0
    %v1956 = vmax.f32 %v1932, 0.0
    %v1957 = vmax.f32 %v1933, 0.0
    %v1958 = vmax.f32 %v1934, 0.0
    %v1959 = vmax.f32 %v1935, 0.0
    %v1960 = vmax.f32 %v1936, 0.0
    %v1961 = vmax.f32 %v1937, 0.0
    %v1962 = vmax.f32 %v1938, 0.0
    %v1963 = vmax.f32 %v1939, 0.0
    %v1964 = vmax.f32 %v1940, 0.0
    %v1965 = vmax.f32 %v1941, 0.0
    %v1966 = vmax.f32 %v1942, 0.0
    %v1967 = vmax.f32 %v1943, 0.0
    %v1968 = vmax.f32 %v1944, 0.0
    %v1969 = vmax.f32 %v1945, 0.0
    %v1970 = vmax.f32 %v1946, 0.0
    %v1971 = vmax.f32 %v1947, 0.0
    %v1972 = vmax.f32 %v1948, 0.0
    %v1973 = vmax.f32 %v1949, 0.0
    %1998 = vrot.lane.b32.xlu0 %v1950, 64
    %v1999 = vpop.permute.xlu0 %1998
    %2000 = vrot.lane.b32.xlu0 %v1951, 64
    %v2001 = vpop.permute.xlu0 %2000
    %2002 = vrot.lane.b32.xlu0 %v1952, 64
    %v2003 = vpop.permute.xlu0 %2002
    %2004 = vrot.lane.b32.xlu0 %v1953, 64
    %v2005 = vpop.permute.xlu0 %2004
    %2006 = vrot.lane.b32.xlu0 %v1954, 64
    %v2007 = vpop.permute.xlu0 %2006
    %2008 = vrot.lane.b32.xlu0 %v1955, 64
    %v2009 = vpop.permute.xlu0 %2008
    %2010 = vrot.lane.b32.xlu0 %v1956, 64
    %v2011 = vpop.permute.xlu0 %2010
    %2012 = vrot.lane.b32.xlu0 %v1957, 64
    %v2013 = vpop.permute.xlu0 %2012
    %2014 = vrot.lane.b32.xlu0 %v1958, 64
    %v2015 = vpop.permute.xlu0 %2014
    %2016 = vrot.lane.b32.xlu0 %v1959, 64
    %v2017 = vpop.permute.xlu0 %2016
    %2018 = vrot.lane.b32.xlu0 %v1960, 64
    %v2019 = vpop.permute.xlu0 %2018
    %2020 = vrot.lane.b32.xlu0 %v1961, 64
    %v2021 = vpop.permute.xlu0 %2020
    %2022 = vrot.lane.b32.xlu0 %v1962, 64
    %v2023 = vpop.permute.xlu0 %2022
    %2024 = vrot.lane.b32.xlu0 %v1963, 64
    %v2025 = vpop.permute.xlu0 %2024
    %2026 = vrot.lane.b32.xlu0 %v1964, 64
    %v2027 = vpop.permute.xlu0 %2026
    %2028 = vrot.lane.b32.xlu0 %v1965, 64
    %v2029 = vpop.permute.xlu0 %2028
    %2030 = vrot.lane.b32.xlu0 %v1966, 64
    %v2031 = vpop.permute.xlu0 %2030
    %2032 = vrot.lane.b32.xlu0 %v1967, 64
    %v2033 = vpop.permute.xlu0 %2032
    %2034 = vrot.lane.b32.xlu0 %v1968, 64
    %v2035 = vpop.permute.xlu0 %2034
    %2036 = vrot.lane.b32.xlu0 %v1969, 64
    %v2037 = vpop.permute.xlu0 %2036
    %2038 = vrot.lane.b32.xlu0 %v1970, 64
    %v2039 = vpop.permute.xlu0 %2038
    %2040 = vrot.lane.b32.xlu0 %v1971, 64
    %v2041 = vpop.permute.xlu0 %2040
    %2042 = vrot.lane.b32.xlu0 %v1972, 64
    %v2043 = vpop.permute.xlu0 %2042
    %2044 = vrot.lane.b32.xlu0 %v1973, 64
    %v2045 = vpop.permute.xlu0 %2044
    %v2070 = vmax.f32 %v1950, %v1999
    %v2071 = vmax.f32 %v1951, %v2001
    %v2072 = vmax.f32 %v1952, %v2003
    %v2073 = vmax.f32 %v1953, %v2005
    %v2074 = vmax.f32 %v1954, %v2007
    %v2075 = vmax.f32 %v1955, %v2009
    %v2076 = vmax.f32 %v1956, %v2011
    %v2077 = vmax.f32 %v1957, %v2013
    %v2078 = vmax.f32 %v1958, %v2015
    %v2079 = vmax.f32 %v1959, %v2017
    %v2080 = vmax.f32 %v1960, %v2019
    %v2081 = vmax.f32 %v1961, %v2021
    %v2082 = vmax.f32 %v1962, %v2023
    %v2083 = vmax.f32 %v1963, %v2025
    %v2084 = vmax.f32 %v1964, %v2027
    %v2085 = vmax.f32 %v1965, %v2029
    %v2086 = vmax.f32 %v1966, %v2031
    %v2087 = vmax.f32 %v1967, %v2033
    %v2088 = vmax.f32 %v1968, %v2035
    %v2089 = vmax.f32 %v1969, %v2037
    %v2090 = vmax.f32 %v1970, %v2039
    %v2091 = vmax.f32 %v1971, %v2041
    %v2092 = vmax.f32 %v1972, %v2043
    %v2093 = vmax.f32 %v1973, %v2045
    %v2094 = vmax.f32 %v2070, %v2072
    %v2095 = vmax.f32 %v2071, %v2073
    %vm2096 = vcmask 523264
    %2097 = vst.msk [vmem:[#allocation3] sm:$0xff] %vm2096, %v2094
    %2098 = vst.msk [vmem:[#allocation3 + $0x18] sm:$0xff] %vm2096, %v2095
    %v2099 = vmax.f32 %v2074, %v2076
    %v2100 = vmax.f32 %v2075, %v2077
    %2103 = vrot.lane.b32.xlu0 %v2099, 64
    %v2104 = vpop.permute.xlu0 %2103
    %2105 = vrot.lane.b32.xlu0 %v2100, 64
    %v2106 = vpop.permute.xlu0 %2105
    %vm2109 = vcmask 1048064
    %2110 = vst.msk [vmem:[#allocation3] sm:$0xff] %vm2109, %v2104
    %2111 = vst.msk [vmem:[#allocation3 + $0x18] sm:$0xff] %vm2109, %v2106
    %v2112 = vmax.f32 %v2078, %v2080
    %v2113 = vmax.f32 %v2079, %v2081
    %2114 = vst.msk [vmem:[#allocation3 + $0x8] sm:$0xff] %vm2096, %v2112
    %2115 = vst.msk [vmem:[#allocation3 + $0x20] sm:$0xff] %vm2096, %v2113
    %v2116 = vmax.f32 %v2082, %v2084
    %v2117 = vmax.f32 %v2083, %v2085
    %2120 = vrot.lane.b32.xlu0 %v2116, 64
    %v2121 = vpop.permute.xlu0 %2120
    %2122 = vrot.lane.b32.xlu0 %v2117, 64
    %v2123 = vpop.permute.xlu0 %2122
    %2126 = vst.msk [vmem:[#allocation3 + $0x8] sm:$0xff] %vm2109, %v2121
    %2127 = vst.msk [vmem:[#allocation3 + $0x20] sm:$0xff] %vm2109, %v2123
    %v2128 = vmax.f32 %v2086, %v2088
    %v2129 = vmax.f32 %v2087, %v2089
    %2130 = vst.msk [vmem:[#allocation3 + $0x10] sm:$0xff] %vm2096, %v2128
    %2131 = vst.msk [vmem:[#allocation3 + $0x28] sm:$0xff] %vm2096, %v2129
    %v2132 = vmax.f32 %v2090, %v2092
    %v2133 = vmax.f32 %v2091, %v2093
    %2136 = vrot.lane.b32.xlu0 %v2132, 64
    %v2137 = vpop.permute.xlu0 %2136
    %2138 = vrot.lane.b32.xlu0 %v2133, 64
    %v2139 = vpop.permute.xlu0 %2138
    %2142 = vst.msk [vmem:[#allocation3 + $0x10] sm:$0xff] %vm2109, %v2137
    %2143 = vst.msk [vmem:[#allocation3 + $0x28] sm:$0xff] %vm2109, %v2139
    %v2144 = vld [vmem:[#allocation3] sm:$0xff]
    %v2145 = vld [vmem:[#allocation3 + $0x8] sm:$0xff]
    %v2146 = vld [vmem:[#allocation3 + $0x10] sm:$0xff]
    %v2147 = vld [vmem:[#allocation3 + $0x18] sm:$0xff]
    %v2148 = vld [vmem:[#allocation3 + $0x20] sm:$0xff]
    %v2149 = vld [vmem:[#allocation3 + $0x28] sm:$0xff]
    %v2150 = vpack.c.bf16 %v2147, %v2144
    %v2151 = vpack.c.bf16 %v2148, %v2145
    %v2152 = vpack.c.bf16 %v2149, %v2146
    %v2153 = vld [vmem:[#allocation9] sm:$0xf]
    %v2154 = vld [vmem:[#allocation9 + $0x4] sm:$0xf]
    %v2155 = vld [vmem:[#allocation9 + $0x8] sm:$0xf]
    %v2156 = vld [vmem:[#allocation9 + $0xc] sm:$0xf]
    %v2157 = vld [vmem:[#allocation9 + $0x10] sm:$0xf]
    %v2158 = vld [vmem:[#allocation9 + $0x14] sm:$0xf]
    %v2159 = vld [vmem:[#allocation9 + $0x18] sm:$0xf]
    %v2160 = vld [vmem:[#allocation9 + $0x1c] sm:$0xf]
    %v2161 = vld [vmem:[#allocation9 + $0x20] sm:$0xf]
    %v2162 = vld [vmem:[#allocation9 + $0x24] sm:$0xf]
    %v2163 = vld [vmem:[#allocation9 + $0x28] sm:$0xf]
    %v2164 = vld [vmem:[#allocation9 + $0x2c] sm:$0xf]
    %v2165 = vld [vmem:[#allocation9 + $0x30] sm:$0xf]
    %v2166 = vld [vmem:[#allocation9 + $0x34] sm:$0xf]
    %v2167 = vld [vmem:[#allocation9 + $0x38] sm:$0xf]
    %v2168 = vld [vmem:[#allocation9 + $0x3c] sm:$0xf]
    %v2169 = vld [vmem:[#allocation9 + $0x40] sm:$0xf]
    %v2170 = vld [vmem:[#allocation9 + $0x44] sm:$0xf]
    %v2171 = vld [vmem:[#allocation9 + $0x48] sm:$0xf]
    %v2172 = vld [vmem:[#allocation9 + $0x4c] sm:$0xf]
    %v2173 = vld [vmem:[#allocation9 + $0x50] sm:$0xf]
    %v2174 = vld [vmem:[#allocation9 + $0x54] sm:$0xf]
    %v2175 = vld [vmem:[#allocation9 + $0x58] sm:$0xf]
    %v2176 = vld [vmem:[#allocation9 + $0x5c] sm:$0xf]
    %v2177 = vld [vmem:[#allocation9 + $0x60] sm:$0xf]
    %v2178 = vld [vmem:[#allocation9 + $0x64] sm:$0xf]
    %v2179 = vld [vmem:[#allocation9 + $0x68] sm:$0xf]
    %v2180 = vld [vmem:[#allocation9 + $0x6c] sm:$0xf]
    %v2181 = vld [vmem:[#allocation9 + $0x70] sm:$0xf]
    %v2182 = vld [vmem:[#allocation9 + $0x74] sm:$0xf]
    %v2183 = vld [vmem:[#allocation9 + $0x78] sm:$0xf]
    %v2184 = vld [vmem:[#allocation9 + $0x7c] sm:$0xf]
    %v2185 = vld [vmem:[#allocation9 + $0x80] sm:$0xf]
    %v2186 = vld [vmem:[#allocation9 + $0x84] sm:$0xf]
    %v2187 = vld [vmem:[#allocation9 + $0x88] sm:$0xf]
    %v2188 = vld [vmem:[#allocation9 + $0x8c] sm:$0xf]
    %v2189 = vld [vmem:[#allocation9 + $0x90] sm:$0xf]
    %v2190 = vld [vmem:[#allocation9 + $0x94] sm:$0xf]
    %v2191 = vld [vmem:[#allocation9 + $0x98] sm:$0xf]
    %v2192 = vld [vmem:[#allocation9 + $0x9c] sm:$0xf]
    %v2193 = vld [vmem:[#allocation9 + $0xa0] sm:$0xf]
    %v2194 = vld [vmem:[#allocation9 + $0xa4] sm:$0xf]
    %v2195 = vld [vmem:[#allocation9 + $0xa8] sm:$0xf]
    %v2196 = vld [vmem:[#allocation9 + $0xac] sm:$0xf]
    %v2197 = vld [vmem:[#allocation9 + $0xb0] sm:$0xf]
    %v2198 = vld [vmem:[#allocation9 + $0xb4] sm:$0xf]
    %v2199 = vld [vmem:[#allocation9 + $0xb8] sm:$0xf]
    %v2200 = vld [vmem:[#allocation9 + $0xbc] sm:$0xf]
    %v2201 = vld [vmem:[%s8] sm:$0x1]
    %v2203 = vperm.slane %v2201, 0
    %v2253 = vunpack.c.l.b16 %v2153
    %v2254 = vunpack.c.l.b16 %v2154
    %v2255 = vunpack.c.l.b16 %v2155
    %v2256 = vunpack.c.l.b16 %v2156
    %v2257 = vunpack.c.l.b16 %v2157
    %v2258 = vunpack.c.l.b16 %v2158
    %v2259 = vunpack.c.l.b16 %v2159
    %v2260 = vunpack.c.l.b16 %v2160
    %v2261 = vunpack.c.l.b16 %v2161
    %v2262 = vunpack.c.l.b16 %v2162
    %v2263 = vunpack.c.l.b16 %v2163
    %v2264 = vunpack.c.l.b16 %v2164
    %v2265 = vunpack.c.l.b16 %v2165
    %v2266 = vunpack.c.l.b16 %v2166
    %v2267 = vunpack.c.l.b16 %v2167
    %v2268 = vunpack.c.l.b16 %v2168
    %v2269 = vunpack.c.l.b16 %v2169
    %v2270 = vunpack.c.l.b16 %v2170
    %v2271 = vunpack.c.l.b16 %v2171
    %v2272 = vunpack.c.l.b16 %v2172
    %v2273 = vunpack.c.l.b16 %v2173
    %v2274 = vunpack.c.l.b16 %v2174
    %v2275 = vunpack.c.l.b16 %v2175
    %v2276 = vunpack.c.l.b16 %v2176
    %v2277 = vunpack.c.l.b16 %v2177
    %v2278 = vunpack.c.l.b16 %v2178
    %v2279 = vunpack.c.l.b16 %v2179
    %v2280 = vunpack.c.l.b16 %v2180
    %v2281 = vunpack.c.l.b16 %v2181
    %v2282 = vunpack.c.l.b16 %v2182
    %v2283 = vunpack.c.l.b16 %v2183
    %v2284 = vunpack.c.l.b16 %v2184
    %v2285 = vunpack.c.l.b16 %v2185
    %v2286 = vunpack.c.l.b16 %v2186
    %v2287 = vunpack.c.l.b16 %v2187
    %v2288 = vunpack.c.l.b16 %v2188
    %v2289 = vunpack.c.l.b16 %v2189
    %v2290 = vunpack.c.l.b16 %v2190
    %v2291 = vunpack.c.l.b16 %v2191
    %v2292 = vunpack.c.l.b16 %v2192
    %v2293 = vunpack.c.l.b16 %v2193
    %v2294 = vunpack.c.l.b16 %v2194
    %v2295 = vunpack.c.l.b16 %v2195
    %v2296 = vunpack.c.l.b16 %v2196
    %v2297 = vunpack.c.l.b16 %v2197
    %v2298 = vunpack.c.l.b16 %v2198
    %v2299 = vunpack.c.l.b16 %v2199
    %v2300 = vunpack.c.l.b16 %v2200
    %v2301 = vpack.c.b16 %v2254, %v2253
    %v2302 = vpack.c.b16 %v2256, %v2255
    %v2303 = vpack.c.b16 %v2258, %v2257
    %v2304 = vpack.c.b16 %v2260, %v2259
    %v2305 = vpack.c.b16 %v2262, %v2261
    %v2306 = vpack.c.b16 %v2264, %v2263
    %v2307 = vpack.c.b16 %v2266, %v2265
    %v2308 = vpack.c.b16 %v2268, %v2267
    %v2309 = vpack.c.b16 %v2270, %v2269
    %v2310 = vpack.c.b16 %v2272, %v2271
    %v2311 = vpack.c.b16 %v2274, %v2273
    %v2312 = vpack.c.b16 %v2276, %v2275
    %v2313 = vpack.c.b16 %v2278, %v2277
    %v2314 = vpack.c.b16 %v2280, %v2279
    %v2315 = vpack.c.b16 %v2282, %v2281
    %v2316 = vpack.c.b16 %v2284, %v2283
    %v2317 = vpack.c.b16 %v2286, %v2285
    %v2318 = vpack.c.b16 %v2288, %v2287
    %v2319 = vpack.c.b16 %v2290, %v2289
    %v2320 = vpack.c.b16 %v2292, %v2291
    %v2321 = vpack.c.b16 %v2294, %v2293
    %v2322 = vpack.c.b16 %v2296, %v2295
    %v2323 = vpack.c.b16 %v2298, %v2297
    %v2324 = vpack.c.b16 %v2300, %v2299
    %2349 = vmatpush.bf16.msra.mxu0 %v2308
    %2350 = vmatpush.bf16.msra.mxu0 %v2307
    %2351 = vmatpush.bf16.msra.mxu0 %v2306
    %2352 = vmatpush.bf16.msra.mxu0 %v2305
    %2353 = vmatpush.bf16.msra.mxu0 %v2304
    %2354 = vmatpush.bf16.msra.mxu0 %v2303
    %2355 = vmatpush.bf16.msra.mxu0 %v2302
    %2356 = vmatpush.bf16.msra.mxu0 %v2301
    %2357 = vmatmul.bf16.gmra.mxu0 %v2150
    %v2358 = vpop.f32.mrf.mxu0
    %v2359 = vadd.f32 %v2203, %v2358
    %v2360 = vpop.f32.mrf.mxu0
    %v2361 = vadd.f32 %v2203, %v2360
    %2362 = vdwg.mxu0
    %2363 = vmatpush.bf16.msra.mxu0 %v2316
    %2364 = vmatpush.bf16.msra.mxu0 %v2315
    %2365 = vmatpush.bf16.msra.mxu0 %v2314
    %2366 = vmatpush.bf16.msra.mxu0 %v2313
    %2367 = vmatpush.bf16.msra.mxu0 %v2312
    %2368 = vmatpush.bf16.msra.mxu0 %v2311
    %2369 = vmatpush.bf16.msra.mxu0 %v2310
    %2370 = vmatpush.bf16.msra.mxu0 %v2309
    %2371 = vmatmul.bf16.gmra.mxu0 %v2151
    %v2372 = vpop.f32.mrf.mxu0
    %v2373 = vadd.f32 %v2359, %v2372
    %v2374 = vpop.f32.mrf.mxu0
    %v2375 = vadd.f32 %v2361, %v2374
    %2376 = vdwg.mxu0
    %2377 = vmatpush.bf16.msra.mxu0 %v2324
    %2378 = vmatpush.bf16.msra.mxu0 %v2323
    %2379 = vmatpush.bf16.msra.mxu0 %v2322
    %2380 = vmatpush.bf16.msra.mxu0 %v2321
    %2381 = vmatpush.bf16.msra.mxu0 %v2320
    %2382 = vmatpush.bf16.msra.mxu0 %v2319
    %2383 = vmatpush.bf16.msra.mxu0 %v2318
    %2384 = vmatpush.bf16.msra.mxu0 %v2317
    %2385 = vmatmul.bf16.gmra.mxu0 %v2152
    %v2386 = vpop.f32.mrf.mxu0
    %v2387 = vadd.f32 %v2373, %v2386
    %v2388 = vpop.f32.mrf.mxu0
    %v2389 = vadd.f32 %v2375, %v2388
    %2390 = vdwg.mxu0
    %v2391 = vmax.f32 %v2387, 0.0
    %v2392 = vmax.f32 %v2389, 0.0
    %v2393 = vpack.c.bf16 %v2392, %v2391
    %v2394 = vld [vmem:[#allocation11] sm:$0xf]
    %v2395 = vld [vmem:[#allocation11 + $0x4] sm:$0xf]
    %v2396 = vld [vmem:[#allocation11 + $0x8] sm:$0xf]
    %v2397 = vld [vmem:[#allocation11 + $0xc] sm:$0xf]
    %v2398 = vld [vmem:[#allocation11 + $0x10] sm:$0xf]
    %v2399 = vld [vmem:[#allocation11 + $0x14] sm:$0xf]
    %v2400 = vld [vmem:[#allocation11 + $0x18] sm:$0xf]
    %v2401 = vld [vmem:[#allocation11 + $0x1c] sm:$0xf]
    %v2402 = vld [vmem:[#allocation11 + $0x20] sm:$0xf]
    %v2403 = vld [vmem:[#allocation11 + $0x24] sm:$0xf]
    %v2404 = vld [vmem:[#allocation11 + $0x28] sm:$0xf]
    %v2405 = vld [vmem:[#allocation11 + $0x2c] sm:$0xf]
    %v2406 = vld [vmem:[#allocation11 + $0x30] sm:$0xf]
    %v2407 = vld [vmem:[#allocation11 + $0x34] sm:$0xf]
    %v2408 = vld [vmem:[#allocation11 + $0x38] sm:$0xf]
    %v2409 = vld [vmem:[#allocation11 + $0x3c] sm:$0xf]
    %v2410 = vld [vmem:[%s10] sm:$0x1]
    %v2412 = vperm.slane %v2410, 0
    %v2430 = vunpack.c.l.b16 %v2394
    %v2431 = vunpack.c.l.b16 %v2395
    %v2432 = vunpack.c.l.b16 %v2396
    %v2433 = vunpack.c.l.b16 %v2397
    %v2434 = vunpack.c.l.b16 %v2398
    %v2435 = vunpack.c.l.b16 %v2399
    %v2436 = vunpack.c.l.b16 %v2400
    %v2437 = vunpack.c.l.b16 %v2401
    %v2438 = vunpack.c.l.b16 %v2402
    %v2439 = vunpack.c.l.b16 %v2403
    %v2440 = vunpack.c.l.b16 %v2404
    %v2441 = vunpack.c.l.b16 %v2405
    %v2442 = vunpack.c.l.b16 %v2406
    %v2443 = vunpack.c.l.b16 %v2407
    %v2444 = vunpack.c.l.b16 %v2408
    %v2445 = vunpack.c.l.b16 %v2409
    %v2446 = vpack.c.b16 %v2431, %v2430
    %v2447 = vpack.c.b16 %v2433, %v2432
    %v2448 = vpack.c.b16 %v2435, %v2434
    %v2449 = vpack.c.b16 %v2437, %v2436
    %v2450 = vpack.c.b16 %v2439, %v2438
    %v2451 = vpack.c.b16 %v2441, %v2440
    %v2452 = vpack.c.b16 %v2443, %v2442
    %v2453 = vpack.c.b16 %v2445, %v2444
    %2462 = vmatpush.bf16.msra.mxu0 %v2453
    %2463 = vmatpush.bf16.msra.mxu0 %v2452
    %2464 = vmatpush.bf16.msra.mxu0 %v2451
    %2465 = vmatpush.bf16.msra.mxu0 %v2450
    %2466 = vmatpush.bf16.msra.mxu0 %v2449
    %2467 = vmatpush.bf16.msra.mxu0 %v2448
    %2468 = vmatpush.bf16.msra.mxu0 %v2447
    %2469 = vmatpush.bf16.msra.mxu0 %v2446
    %2470 = vmatmul.bf16.gmra.mxu0 %v2393
    %v2471 = vpop.f32.mrf.mxu0
    %v2472 = vadd.f32 %v2412, %v2471
    %v2473 = vpop.f32.mrf.mxu0
    %v2474 = vadd.f32 %v2412, %v2473
    %2475 = vdwg.mxu0
    %2476 = vmax.xlane.f32.xlu0 %v2472
    %v2477 = vpop.xlane.xlu0 %2476
    %2478 = vmax.xlane.f32.xlu0 %v2474
    %v2479 = vpop.xlane.xlu0 %2478
    %v2480 = vsub.f32 %v2472, %v2477
    %v2481 = vsub.f32 %v2474, %v2479
    %v2482 = vmul.f32 %v2480, 1.442695
    %v2483 = vpow.pop %v2482
    %v2484 = vmul.f32 %v2481, 1.442695
    %v2485 = vpow.pop %v2484
    %2486 = vadd.xlane.f32.xlu0 %v2483
    %v2487 = vpop.xlane.xlu0 %2486
    %2488 = vadd.xlane.f32.xlu0 %v2485
    %v2489 = vpop.xlane.xlu0 %2488
    %v2490 = vlog2.pop %v2487
    %v2491 = vmul.f32 %v2490, 0.6931472
    %v2492 = vlog2.pop %v2489
    %v2493 = vmul.f32 %v2492, 0.6931472
    %v2494 = vsub.f32 %v2480, %v2491
    %v2495 = vsub.f32 %v2481, %v2493
    %2496 = vst [vmem:[%s11] sm:$0xff] %v2494
    %2497 = vst [vmem:[%s11 + $0x8] sm:$0xff] %v2495
    // Predicated region
    $region66: #{servernet_forward.1} parent=1 // pred_check
      _
    $region67: #{servernet_forward.1} parent=1 // pred_check_branch
      %2499 = sbr.rel (0) target = $region69
    $region68: #{servernet_forward.1} parent=1 // pred_region
      _
    $region69: #{servernet_forward.1} parent=1 // pred_fallthru
      _
    // Predicated region
    $region70: #{servernet_forward.1} parent=1 // pred_check
      _
    $region71: #{servernet_forward.1} parent=1 // pred_check_branch
      %2501 = sbr.rel (0) target = $region73
    $region72: #{servernet_forward.1} parent=1 // pred_region
      _
    $region73: #{servernet_forward.1} parent=1 // pred_fallthru
      _
    %2502 = vsyncpa [#allocation5], 1
    %2503 = vsyncpa [#allocation7], 1
    %2504 = vsyncpa [#allocation10], 1

</llo_original>
